<compile_context>
chip_gen: v7x
topology: tpu7x:2x2x1
jax: 0.10.0
libtpu: 0.0.40
codegen_flags: <defaults>
</compile_context>

<pallas_src>
import functools

import jax
import jax.numpy as jnp
from jax.experimental import pallas as pl
from jax.experimental.pallas import tpu as pltpu


def _decoder_gru_wavefront_kernel(T, B, H, L,
                                  x_ref, h0_ref, wih0_ref, bihf_ref, bhhn_ref,
                                  wrec_ref, out_ref, hT_ref):
    """Fused L-layer, T-step GRU, wavefront-scheduled. Single invocation, all VMEM.

    x_ref    : (T*B, H)   input sequence, time-major, flattened
    h0_ref   : (L, B, H)  initial hidden state per layer
    wih0_ref : (H, 3H)    layer-0 input weights, transposed, gates [r|z|n]
    bihf_ref : (L, 1, 3H) folded input bias per layer: [b_ir+b_hr | b_iz+b_hz | b_in]
    bhhn_ref : (L, 1, H)  n-gate hidden bias per layer (kept separate, PyTorch rule)
    wrec_ref : (L, H, 6H) per layer: [Whh_l^T (gates r|z|n) | Wih_{l+1}^T (gates r|z|n)]
                          (last layer's right half is zeros, never read)
    out_ref  : (T*B, H)   final-layer outputs for all timesteps
    hT_ref   : (L, B, H)  final hidden state per layer
    """
    f32 = jnp.float32

    # ---- Hoisted layer-0 input projection: one matmul for all T steps. ----
    gi0 = (jnp.dot(x_ref[...].astype(f32), wih0_ref[...].astype(f32),
                   preferred_element_type=f32)
           + bihf_ref[0].astype(f32))                 # (T*B, 3H)
    gi0 = gi0.reshape(T, B, 3 * H)                    # one relayout, amortized over T

    # ---- Per-layer constants: loaded / broadcast ONCE, outside the wave loop. ----
    wrec = [wrec_ref[l].astype(f32) for l in range(L)]                        # (H, 6H)
    bihf_b = {l: jnp.broadcast_to(bihf_ref[l].astype(f32), (B, 3 * H))
              for l in range(1, L)}                                           # (B, 3H)
    bhhn_b = [jnp.broadcast_to(bhhn_ref[l].astype(f32), (B, H))
              for l in range(L)]                                              # (B, H)
    h = [h0_ref[l].astype(f32) for l in range(L)]                             # (B, H)

    outs = []
    # ---- Wavefront: wave s runs layer l at time t = s - l. 16 -> 9 serial steps. ----
    for s in range(T + L - 1):
        # Matmuls first, all from start-of-wave hidden values. For layer l the
        # merged RHS gives both its own g_h (cols 0:3H) and the next layer's
        # input projection g_i (cols 3H:6H) -- both need the SAME h_l value.
        m = [None] * L
        for l in range(L):
            need = (0 <= s - l < T) or (l + 1 < L and 0 <= s - l - 1 < T)
            if need:
                m[l] = jnp.dot(h[l], wrec[l], preferred_element_type=f32)     # (B, 6H)

        new_h = list(h)
        for l in range(L):
            t = s - l
            if not (0 <= t < T):
                continue
            if l == 0:
                g_i = gi0[t]                                   # bias already folded in
            else:
                g_i = m[l - 1][:, 3 * H:6 * H] + bihf_b[l]
            g_h = m[l][:, 0:3 * H]
            # PyTorch GRU gate order r, z, n; all gate math in f32.
            r = jax.nn.sigmoid(g_i[:, 0:H] + g_h[:, 0:H])
            z = jax.nn.sigmoid(g_i[:, H:2 * H] + g_h[:, H:2 * H])
            n = jnp.tanh(g_i[:, 2 * H:3 * H] + r * (g_h[:, 2 * H:3 * H] + bhhn_b[l]))
            new_h[l] = (1.0 - z) * n + z * h[l]
            if l == L - 1:
                outs.append(new_h[l])
        h = new_h

    # ---- Single writeback (no per-step masked stores). ----
    out_ref[...] = jnp.concatenate(outs, axis=0).astype(out_ref.dtype)        # (T*B, H)
    for l in range(L):
        hT_ref[l] = h[l].astype(hT_ref.dtype)


def pack_decoder_params(params):
    """Host-side packing; call ONCE at init time (hoisted out of the jitted path).

    params: list of (wih(3,H,H), whh(3,H,H), bih(3,1,H), bhh(3,1,H)) per layer,
            PyTorch GRU gate order [r, z, n].
    Returns (wih0 (H,3H), bihf (L,1,3H), bhhn (L,1,H), wrec (L,H,6H)).
    """
    L = len(params)
    H = params[0][0].shape[-1]

    def gate_cat_T(w):  # (3,H,H) -> (H,3H), transposed, gates [r|z|n]
        return jnp.concatenate([w[0].T, w[1].T, w[2].T], axis=1)

    wih0 = gate_cat_T(params[0][0])
    wrec, bihf, bhhn = [], [], []
    for l in range(L):
        _, whh, bih, bhh = params[l]
        whhT = gate_cat_T(whh)                                          # (H, 3H)
        if l + 1 < L:
            wih_nextT = gate_cat_T(params[l + 1][0])                    # (H, 3H)
        else:
            wih_nextT = jnp.zeros((H, 3 * H), whhT.dtype)
        wrec.append(jnp.concatenate([whhT, wih_nextT], axis=1))         # (H, 6H)
        # Fold b_hr, b_hz into the input bias; keep b_hn separate (n-gate rule).
        bihf.append(jnp.concatenate([bih[0] + bhh[0], bih[1] + bhh[1], bih[2]],
                                    axis=1))                            # (1, 3H)
        bhhn.append(bhh[2])                                             # (1, H)
    return wih0, jnp.stack(bihf), jnp.stack(bhhn), jnp.stack(wrec)


@jax.jit
def decoder_forward(response, encoder_h, wih0, bihf, bhhn, wrec):
    """Equivalent of Decoder.forward(response, encoder_h).

    response : (T, B, H) time-major
    encoder_h: (n_layers, B, H)
    packed params from pack_decoder_params().
    Returns (output (T, B, H), h (n_layers, B, H)).
    """
    T, B, H = response.shape
    L = encoder_h.shape[0]

    kernel = functools.partial(_decoder_gru_wavefront_kernel, T, B, H, L)
    vmem = pl.BlockSpec(memory_space=pltpu.MemorySpace.VMEM)

    out_flat, h_final = pl.pallas_call(
        kernel,
        out_shape=(
            jax.ShapeDtypeStruct((T * B, H), response.dtype),
            jax.ShapeDtypeStruct((L, B, H), encoder_h.dtype),
        ),
        in_specs=[vmem] * 6,
        out_specs=(vmem, vmem),
    )(response.reshape(T * B, H), encoder_h, wih0, bihf, bhhn, wrec)

    return out_flat.reshape(T, B, H), h_final


def _gru_reference(response, encoder_h, params):
    """Pure-JAX reference (PyTorch GRU equations) for verification."""
    x = response
    finals = []
    for l, (wih, whh, bih, bhh) in enumerate(params):
        h = encoder_h[l]
        outs = []
        for t in range(x.shape[0]):
            xt = x[t]
            r = jax.nn.sigmoid(xt @ wih[0].T + bih[0] + h @ whh[0].T + bhh[0])
            z = jax.nn.sigmoid(xt @ wih[1].T + bih[1] + h @ whh[1].T + bhh[1])
            n = jnp.tanh(xt @ wih[2].T + bih[2] + r * (h @ whh[2].T + bhh[2]))
            h = (1.0 - z) * n + z * h
            outs.append(h)
        x = jnp.stack(outs, axis=0)
        finals.append(h)
    return x, jnp.stack(finals, axis=0)


def init_params(key, n_layers, hidden_size):
    """Deterministic init matching PyTorch GRU shapes: uniform(-k, k), k=1/sqrt(H)."""
    k = 1.0 / jnp.sqrt(jnp.float32(hidden_size))
    params = []
    for _ in range(n_layers):
        key, k1, k2, k3, k4 = jax.random.split(key, 5)
        wih = jax.random.uniform(k1, (3, hidden_size, hidden_size), jnp.float32, -k, k)
        whh = jax.random.uniform(k2, (3, hidden_size, hidden_size), jnp.float32, -k, k)
        bih = jax.random.uniform(k3, (3, 1, hidden_size), jnp.float32, -k, k)
        bhh = jax.random.uniform(k4, (3, 1, hidden_size), jnp.float32, -k, k)
        params.append((wih, whh, bih, bhh))
    return params


if __name__ == "__main__":
    # Small shapes consistent with the module: seq=8, batch=2, hidden=32, n_layers=2
    T, B, H, L = 8, 2, 32, 2
    key = jax.random.PRNGKey(0)
    k_resp, k_h, k_par = jax.random.split(key, 3)

    response = jax.random.normal(k_resp, (T, B, H), jnp.float32)
    encoder_h = jax.random.normal(k_h, (L, B, H), jnp.float32)
    params = init_params(k_par, L, H)

    # Pack once at init time (hoisted out of the jitted forward path).
    wih0, bihf, bhhn, wrec = pack_decoder_params(params)

    out, h = decoder_forward(response, encoder_h, wih0, bihf, bhhn, wrec)
    out = jax.block_until_ready(out)
    h = jax.block_until_ready(h)

    out_ref, h_ref = _gru_reference(response, encoder_h, params)
    assert out.shape == (T, B, H) and h.shape == (L, B, H)
    assert jnp.allclose(out, out_ref, rtol=1e-4, atol=1e-4)
    assert jnp.allclose(h, h_ref, rtol=1e-4, atol=1e-4)

    print("KERNEL_OK")
</pallas_src>

<mosaic_0001>
module attributes {stable_mosaic.version = 11 : i64} {
  func.func @_decoder_gru_wavefront_kernel(%arg0: memref<16x32xf32, #tpu.memory_space<vmem>>, %arg1: memref<2x2x32xf32, #tpu.memory_space<vmem>>, %arg2: memref<32x96xf32, #tpu.memory_space<vmem>>, %arg3: memref<2x1x96xf32, #tpu.memory_space<vmem>>, %arg4: memref<2x1x32xf32, #tpu.memory_space<vmem>>, %arg5: memref<2x32x192xf32, #tpu.memory_space<vmem>>, %arg6: memref<16x32xf32, #tpu.memory_space<vmem>>, %arg7: memref<2x2x32xf32, #tpu.memory_space<vmem>>) attributes {dimension_semantics = [], scalar_prefetch = 0 : i64, scratch_operands = 0 : i64, tpu.core_type = #tpu.core_type<tc>} {
    %c0 = arith.constant 0 : index
    %c0_0 = arith.constant 0 : index
    %0 = vector.load %arg0[%c0, %c0_0] : memref<16x32xf32, #tpu.memory_space<vmem>>, vector<16x32xf32>
    %c0_1 = arith.constant 0 : index
    %c0_2 = arith.constant 0 : index
    %1 = vector.load %arg2[%c0_1, %c0_2] : memref<32x96xf32, #tpu.memory_space<vmem>>, vector<32x96xf32>
    %cst = arith.constant dense<0.000000e+00> : vector<16x96xf32>
    %2 = tpu.matmul %0, %1, %cst {dimension_numbers = #tpu.dot_dimension_numbers<[1], [0], [0], [1], [0, 0, 1, 1], [], []>} : vector<16x32xf32>, vector<32x96xf32>, vector<16x96xf32> -> vector<16x96xf32>
    %c0_3 = arith.constant 0 : index
    %c0_4 = arith.constant 0 : index
    %c0_5 = arith.constant 0 : index
    %3 = vector.load %arg3[%c0_3, %c0_4, %c0_5] : memref<2x1x96xf32, #tpu.memory_space<vmem>>, vector<1x1x96xf32>
    %4 = vector.shape_cast %3 : vector<1x1x96xf32> to vector<1x96xf32>
    %5 = vector.broadcast %4 : vector<1x96xf32> to vector<16x96xf32>
    %6 = arith.addf %2, %5 : vector<16x96xf32>
    %7 = vector.shape_cast %6 : vector<16x96xf32> to vector<8x2x96xf32>
    %c0_6 = arith.constant 0 : index
    %c0_7 = arith.constant 0 : index
    %c0_8 = arith.constant 0 : index
    %8 = vector.load %arg5[%c0_6, %c0_7, %c0_8] : memref<2x32x192xf32, #tpu.memory_space<vmem>>, vector<1x32x192xf32>
    %9 = vector.shape_cast %8 : vector<1x32x192xf32> to vector<32x192xf32>
    %c1 = arith.constant 1 : index
    %c0_9 = arith.constant 0 : index
    %c0_10 = arith.constant 0 : index
    %10 = vector.load %arg5[%c1, %c0_9, %c0_10] : memref<2x32x192xf32, #tpu.memory_space<vmem>>, vector<1x32x192xf32>
    %11 = vector.shape_cast %10 : vector<1x32x192xf32> to vector<32x192xf32>
    %c1_11 = arith.constant 1 : index
    %c0_12 = arith.constant 0 : index
    %c0_13 = arith.constant 0 : index
    %12 = vector.load %arg3[%c1_11, %c0_12, %c0_13] : memref<2x1x96xf32, #tpu.memory_space<vmem>>, vector<1x1x96xf32>
    %13 = vector.shape_cast %12 : vector<1x1x96xf32> to vector<1x96xf32>
    %14 = vector.shape_cast %13 : vector<1x96xf32> to vector<1x96xf32>
    %15 = vector.broadcast %14 : vector<1x96xf32> to vector<2x96xf32>
    %c0_14 = arith.constant 0 : index
    %c0_15 = arith.constant 0 : index
    %c0_16 = arith.constant 0 : index
    %16 = vector.load %arg4[%c0_14, %c0_15, %c0_16] : memref<2x1x32xf32, #tpu.memory_space<vmem>>, vector<1x1x32xf32>
    %17 = vector.shape_cast %16 : vector<1x1x32xf32> to vector<1x32xf32>
    %18 = vector.shape_cast %17 : vector<1x32xf32> to vector<1x32xf32>
    %19 = vector.broadcast %18 : vector<1x32xf32> to vector<2x32xf32>
    %c1_17 = arith.constant 1 : index
    %c0_18 = arith.constant 0 : index
    %c0_19 = arith.constant 0 : index
    %20 = vector.load %arg4[%c1_17, %c0_18, %c0_19] : memref<2x1x32xf32, #tpu.memory_space<vmem>>, vector<1x1x32xf32>
    %21 = vector.shape_cast %20 : vector<1x1x32xf32> to vector<1x32xf32>
    %22 = vector.shape_cast %21 : vector<1x32xf32> to vector<1x32xf32>
    %23 = vector.broadcast %22 : vector<1x32xf32> to vector<2x32xf32>
    %c0_20 = arith.constant 0 : index
    %c0_21 = arith.constant 0 : index
    %c0_22 = arith.constant 0 : index
    %24 = vector.load %arg1[%c0_20, %c0_21, %c0_22] : memref<2x2x32xf32, #tpu.memory_space<vmem>>, vector<1x2x32xf32>
    %25 = vector.shape_cast %24 : vector<1x2x32xf32> to vector<2x32xf32>
    %c1_23 = arith.constant 1 : index
    %c0_24 = arith.constant 0 : index
    %c0_25 = arith.constant 0 : index
    %26 = vector.load %arg1[%c1_23, %c0_24, %c0_25] : memref<2x2x32xf32, #tpu.memory_space<vmem>>, vector<1x2x32xf32>
    %27 = vector.shape_cast %26 : vector<1x2x32xf32> to vector<2x32xf32>
    %cst_26 = arith.constant dense<0.000000e+00> : vector<2x192xf32>
    %28 = tpu.matmul %25, %9, %cst_26 {dimension_numbers = #tpu.dot_dimension_numbers<[1], [0], [0], [1], [0, 0, 1, 1], [], []>} : vector<2x32xf32>, vector<32x192xf32>, vector<2x192xf32> -> vector<2x192xf32>
    %29 = vector.extract_strided_slice %7 {offsets = [0, 0, 0], sizes = [1, 2, 96], strides = [1, 1, 1]} : vector<8x2x96xf32> to vector<1x2x96xf32>
    %30 = vector.shape_cast %29 : vector<1x2x96xf32> to vector<2x96xf32>
    %31 = vector.extract_strided_slice %28 {offsets = [0, 0], sizes = [2, 96], strides = [1, 1]} : vector<2x192xf32> to vector<2x96xf32>
    %32 = vector.extract_strided_slice %30 {offsets = [0, 0], sizes = [2, 32], strides = [1, 1]} : vector<2x96xf32> to vector<2x32xf32>
    %33 = vector.extract_strided_slice %31 {offsets = [0, 0], sizes = [2, 32], strides = [1, 1]} : vector<2x96xf32> to vector<2x32xf32>
    %34 = arith.addf %32, %33 : vector<2x32xf32>
    %35 = arith.negf %34 : vector<2x32xf32>
    %36 = math.exp %35 : vector<2x32xf32>
    %cst_27 = arith.constant 1.000000e+00 : f32
    %37 = vector.broadcast %cst_27 : f32 to vector<2x32xf32>
    %38 = arith.addf %37, %36 : vector<2x32xf32>
    %39 = arith.divf %37, %38 : vector<2x32xf32>
    %40 = vector.extract_strided_slice %30 {offsets = [0, 32], sizes = [2, 32], strides = [1, 1]} : vector<2x96xf32> to vector<2x32xf32>
    %41 = vector.extract_strided_slice %31 {offsets = [0, 32], sizes = [2, 32], strides = [1, 1]} : vector<2x96xf32> to vector<2x32xf32>
    %42 = arith.addf %40, %41 : vector<2x32xf32>
    %43 = arith.negf %42 : vector<2x32xf32>
    %44 = math.exp %43 : vector<2x32xf32>
    %cst_28 = arith.constant 1.000000e+00 : f32
    %45 = vector.broadcast %cst_28 : f32 to vector<2x32xf32>
    %46 = arith.addf %45, %44 : vector<2x32xf32>
    %47 = arith.divf %45, %46 : vector<2x32xf32>
    %48 = vector.extract_strided_slice %30 {offsets = [0, 64], sizes = [2, 32], strides = [1, 1]} : vector<2x96xf32> to vector<2x32xf32>
    %49 = vector.extract_strided_slice %31 {offsets = [0, 64], sizes = [2, 32], strides = [1, 1]} : vector<2x96xf32> to vector<2x32xf32>
    %50 = arith.addf %49, %19 : vector<2x32xf32>
    %51 = arith.mulf %39, %50 : vector<2x32xf32>
    %52 = arith.addf %48, %51 : vector<2x32xf32>
    %53 = math.tanh %52 : vector<2x32xf32>
    %cst_29 = arith.constant 1.000000e+00 : f32
    %54 = vector.broadcast %cst_29 : f32 to vector<2x32xf32>
    %55 = arith.subf %54, %47 : vector<2x32xf32>
    %56 = arith.mulf %55, %53 : vector<2x32xf32>
    %57 = arith.mulf %47, %25 : vector<2x32xf32>
    %58 = arith.addf %56, %57 : vector<2x32xf32>
    %cst_30 = arith.constant dense<0.000000e+00> : vector<2x192xf32>
    %59 = tpu.matmul %58, %9, %cst_30 {dimension_numbers = #tpu.dot_dimension_numbers<[1], [0], [0], [1], [0, 0, 1, 1], [], []>} : vector<2x32xf32>, vector<32x192xf32>, vector<2x192xf32> -> vector<2x192xf32>
    %cst_31 = arith.constant dense<0.000000e+00> : vector<2x192xf32>
    %60 = tpu.matmul %27, %11, %cst_31 {dimension_numbers = #tpu.dot_dimension_numbers<[1], [0], [0], [1], [0, 0, 1, 1], [], []>} : vector<2x32xf32>, vector<32x192xf32>, vector<2x192xf32> -> vector<2x192xf32>
    %61 = vector.extract_strided_slice %7 {offsets = [1, 0, 0], sizes = [1, 2, 96], strides = [1, 1, 1]} : vector<8x2x96xf32> to vector<1x2x96xf32>
    %62 = vector.shape_cast %61 : vector<1x2x96xf32> to vector<2x96xf32>
    %63 = vector.extract_strided_slice %59 {offsets = [0, 0], sizes = [2, 96], strides = [1, 1]} : vector<2x192xf32> to vector<2x96xf32>
    %64 = vector.extract_strided_slice %62 {offsets = [0, 0], sizes = [2, 32], strides = [1, 1]} : vector<2x96xf32> to vector<2x32xf32>
    %65 = vector.extract_strided_slice %63 {offsets = [0, 0], sizes = [2, 32], strides = [1, 1]} : vector<2x96xf32> to vector<2x32xf32>
    %66 = arith.addf %64, %65 : vector<2x32xf32>
    %67 = arith.negf %66 : vector<2x32xf32>
    %68 = math.exp %67 : vector<2x32xf32>
    %cst_32 = arith.constant 1.000000e+00 : f32
    %69 = vector.broadcast %cst_32 : f32 to vector<2x32xf32>
    %70 = arith.addf %69, %68 : vector<2x32xf32>
    %71 = arith.divf %69, %70 : vector<2x32xf32>
    %72 = vector.extract_strided_slice %62 {offsets = [0, 32], sizes = [2, 32], strides = [1, 1]} : vector<2x96xf32> to vector<2x32xf32>
    %73 = vector.extract_strided_slice %63 {offsets = [0, 32], sizes = [2, 32], strides = [1, 1]} : vector<2x96xf32> to vector<2x32xf32>
    %74 = arith.addf %72, %73 : vector<2x32xf32>
    %75 = arith.negf %74 : vector<2x32xf32>
    %76 = math.exp %75 : vector<2x32xf32>
    %cst_33 = arith.constant 1.000000e+00 : f32
    %77 = vector.broadcast %cst_33 : f32 to vector<2x32xf32>
    %78 = arith.addf %77, %76 : vector<2x32xf32>
    %79 = arith.divf %77, %78 : vector<2x32xf32>
    %80 = vector.extract_strided_slice %62 {offsets = [0, 64], sizes = [2, 32], strides = [1, 1]} : vector<2x96xf32> to vector<2x32xf32>
    %81 = vector.extract_strided_slice %63 {offsets = [0, 64], sizes = [2, 32], strides = [1, 1]} : vector<2x96xf32> to vector<2x32xf32>
    %82 = arith.addf %81, %19 : vector<2x32xf32>
    %83 = arith.mulf %71, %82 : vector<2x32xf32>
    %84 = arith.addf %80, %83 : vector<2x32xf32>
    %85 = math.tanh %84 : vector<2x32xf32>
    %cst_34 = arith.constant 1.000000e+00 : f32
    %86 = vector.broadcast %cst_34 : f32 to vector<2x32xf32>
    %87 = arith.subf %86, %79 : vector<2x32xf32>
    %88 = arith.mulf %87, %85 : vector<2x32xf32>
    %89 = arith.mulf %79, %58 : vector<2x32xf32>
    %90 = arith.addf %88, %89 : vector<2x32xf32>
    %91 = vector.extract_strided_slice %59 {offsets = [0, 96], sizes = [2, 96], strides = [1, 1]} : vector<2x192xf32> to vector<2x96xf32>
    %92 = arith.addf %91, %15 : vector<2x96xf32>
    %93 = vector.extract_strided_slice %60 {offsets = [0, 0], sizes = [2, 96], strides = [1, 1]} : vector<2x192xf32> to vector<2x96xf32>
    %94 = vector.extract_strided_slice %92 {offsets = [0, 0], sizes = [2, 32], strides = [1, 1]} : vector<2x96xf32> to vector<2x32xf32>
    %95 = vector.extract_strided_slice %93 {offsets = [0, 0], sizes = [2, 32], strides = [1, 1]} : vector<2x96xf32> to vector<2x32xf32>
    %96 = arith.addf %94, %95 : vector<2x32xf32>
    %97 = arith.negf %96 : vector<2x32xf32>
    %98 = math.exp %97 : vector<2x32xf32>
    %cst_35 = arith.constant 1.000000e+00 : f32
    %99 = vector.broadcast %cst_35 : f32 to vector<2x32xf32>
    %100 = arith.addf %99, %98 : vector<2x32xf32>
    %101 = arith.divf %99, %100 : vector<2x32xf32>
    %102 = vector.extract_strided_slice %92 {offsets = [0, 32], sizes = [2, 32], strides = [1, 1]} : vector<2x96xf32> to vector<2x32xf32>
    %103 = vector.extract_strided_slice %93 {offsets = [0, 32], sizes = [2, 32], strides = [1, 1]} : vector<2x96xf32> to vector<2x32xf32>
    %104 = arith.addf %102, %103 : vector<2x32xf32>
    %105 = arith.negf %104 : vector<2x32xf32>
    %106 = math.exp %105 : vector<2x32xf32>
    %cst_36 = arith.constant 1.000000e+00 : f32
    %107 = vector.broadcast %cst_36 : f32 to vector<2x32xf32>
    %108 = arith.addf %107, %106 : vector<2x32xf32>
    %109 = arith.divf %107, %108 : vector<2x32xf32>
    %110 = vector.extract_strided_slice %92 {offsets = [0, 64], sizes = [2, 32], strides = [1, 1]} : vector<2x96xf32> to vector<2x32xf32>
    %111 = vector.extract_strided_slice %93 {offsets = [0, 64], sizes = [2, 32], strides = [1, 1]} : vector<2x96xf32> to vector<2x32xf32>
    %112 = arith.addf %111, %23 : vector<2x32xf32>
    %113 = arith.mulf %101, %112 : vector<2x32xf32>
    %114 = arith.addf %110, %113 : vector<2x32xf32>
    %115 = math.tanh %114 : vector<2x32xf32>
    %cst_37 = arith.constant 1.000000e+00 : f32
    %116 = vector.broadcast %cst_37 : f32 to vector<2x32xf32>
    %117 = arith.subf %116, %109 : vector<2x32xf32>
    %118 = arith.mulf %117, %115 : vector<2x32xf32>
    %119 = arith.mulf %109, %27 : vector<2x32xf32>
    %120 = arith.addf %118, %119 : vector<2x32xf32>
    %cst_38 = arith.constant dense<0.000000e+00> : vector<2x192xf32>
    %121 = tpu.matmul %90, %9, %cst_38 {dimension_numbers = #tpu.dot_dimension_numbers<[1], [0], [0], [1], [0, 0, 1, 1], [], []>} : vector<2x32xf32>, vector<32x192xf32>, vector<2x192xf32> -> vector<2x192xf32>
    %cst_39 = arith.constant dense<0.000000e+00> : vector<2x192xf32>
    %122 = tpu.matmul %120, %11, %cst_39 {dimension_numbers = #tpu.dot_dimension_numbers<[1], [0], [0], [1], [0, 0, 1, 1], [], []>} : vector<2x32xf32>, vector<32x192xf32>, vector<2x192xf32> -> vector<2x192xf32>
    %123 = vector.extract_strided_slice %7 {offsets = [2, 0, 0], sizes = [1, 2, 96], strides = [1, 1, 1]} : vector<8x2x96xf32> to vector<1x2x96xf32>
    %124 = vector.shape_cast %123 : vector<1x2x96xf32> to vector<2x96xf32>
    %125 = vector.extract_strided_slice %121 {offsets = [0, 0], sizes = [2, 96], strides = [1, 1]} : vector<2x192xf32> to vector<2x96xf32>
    %126 = vector.extract_strided_slice %124 {offsets = [0, 0], sizes = [2, 32], strides = [1, 1]} : vector<2x96xf32> to vector<2x32xf32>
    %127 = vector.extract_strided_slice %125 {offsets = [0, 0], sizes = [2, 32], strides = [1, 1]} : vector<2x96xf32> to vector<2x32xf32>
    %128 = arith.addf %126, %127 : vector<2x32xf32>
    %129 = arith.negf %128 : vector<2x32xf32>
    %130 = math.exp %129 : vector<2x32xf32>
    %cst_40 = arith.constant 1.000000e+00 : f32
    %131 = vector.broadcast %cst_40 : f32 to vector<2x32xf32>
    %132 = arith.addf %131, %130 : vector<2x32xf32>
    %133 = arith.divf %131, %132 : vector<2x32xf32>
    %134 = vector.extract_strided_slice %124 {offsets = [0, 32], sizes = [2, 32], strides = [1, 1]} : vector<2x96xf32> to vector<2x32xf32>
    %135 = vector.extract_strided_slice %125 {offsets = [0, 32], sizes = [2, 32], strides = [1, 1]} : vector<2x96xf32> to vector<2x32xf32>
    %136 = arith.addf %134, %135 : vector<2x32xf32>
    %137 = arith.negf %136 : vector<2x32xf32>
    %138 = math.exp %137 : vector<2x32xf32>
    %cst_41 = arith.constant 1.000000e+00 : f32
    %139 = vector.broadcast %cst_41 : f32 to vector<2x32xf32>
    %140 = arith.addf %139, %138 : vector<2x32xf32>
    %141 = arith.divf %139, %140 : vector<2x32xf32>
    %142 = vector.extract_strided_slice %124 {offsets = [0, 64], sizes = [2, 32], strides = [1, 1]} : vector<2x96xf32> to vector<2x32xf32>
    %143 = vector.extract_strided_slice %125 {offsets = [0, 64], sizes = [2, 32], strides = [1, 1]} : vector<2x96xf32> to vector<2x32xf32>
    %144 = arith.addf %143, %19 : vector<2x32xf32>
    %145 = arith.mulf %133, %144 : vector<2x32xf32>
    %146 = arith.addf %142, %145 : vector<2x32xf32>
    %147 = math.tanh %146 : vector<2x32xf32>
    %cst_42 = arith.constant 1.000000e+00 : f32
    %148 = vector.broadcast %cst_42 : f32 to vector<2x32xf32>
    %149 = arith.subf %148, %141 : vector<2x32xf32>
    %150 = arith.mulf %149, %147 : vector<2x32xf32>
    %151 = arith.mulf %141, %90 : vector<2x32xf32>
    %152 = arith.addf %150, %151 : vector<2x32xf32>
    %153 = vector.extract_strided_slice %121 {offsets = [0, 96], sizes = [2, 96], strides = [1, 1]} : vector<2x192xf32> to vector<2x96xf32>
    %154 = arith.addf %153, %15 : vector<2x96xf32>
    %155 = vector.extract_strided_slice %122 {offsets = [0, 0], sizes = [2, 96], strides = [1, 1]} : vector<2x192xf32> to vector<2x96xf32>
    %156 = vector.extract_strided_slice %154 {offsets = [0, 0], sizes = [2, 32], strides = [1, 1]} : vector<2x96xf32> to vector<2x32xf32>
    %157 = vector.extract_strided_slice %155 {offsets = [0, 0], sizes = [2, 32], strides = [1, 1]} : vector<2x96xf32> to vector<2x32xf32>
    %158 = arith.addf %156, %157 : vector<2x32xf32>
    %159 = arith.negf %158 : vector<2x32xf32>
    %160 = math.exp %159 : vector<2x32xf32>
    %cst_43 = arith.constant 1.000000e+00 : f32
    %161 = vector.broadcast %cst_43 : f32 to vector<2x32xf32>
    %162 = arith.addf %161, %160 : vector<2x32xf32>
    %163 = arith.divf %161, %162 : vector<2x32xf32>
    %164 = vector.extract_strided_slice %154 {offsets = [0, 32], sizes = [2, 32], strides = [1, 1]} : vector<2x96xf32> to vector<2x32xf32>
    %165 = vector.extract_strided_slice %155 {offsets = [0, 32], sizes = [2, 32], strides = [1, 1]} : vector<2x96xf32> to vector<2x32xf32>
    %166 = arith.addf %164, %165 : vector<2x32xf32>
    %167 = arith.negf %166 : vector<2x32xf32>
    %168 = math.exp %167 : vector<2x32xf32>
    %cst_44 = arith.constant 1.000000e+00 : f32
    %169 = vector.broadcast %cst_44 : f32 to vector<2x32xf32>
    %170 = arith.addf %169, %168 : vector<2x32xf32>
    %171 = arith.divf %169, %170 : vector<2x32xf32>
    %172 = vector.extract_strided_slice %154 {offsets = [0, 64], sizes = [2, 32], strides = [1, 1]} : vector<2x96xf32> to vector<2x32xf32>
    %173 = vector.extract_strided_slice %155 {offsets = [0, 64], sizes = [2, 32], strides = [1, 1]} : vector<2x96xf32> to vector<2x32xf32>
    %174 = arith.addf %173, %23 : vector<2x32xf32>
    %175 = arith.mulf %163, %174 : vector<2x32xf32>
    %176 = arith.addf %172, %175 : vector<2x32xf32>
    %177 = math.tanh %176 : vector<2x32xf32>
    %cst_45 = arith.constant 1.000000e+00 : f32
    %178 = vector.broadcast %cst_45 : f32 to vector<2x32xf32>
    %179 = arith.subf %178, %171 : vector<2x32xf32>
    %180 = arith.mulf %179, %177 : vector<2x32xf32>
    %181 = arith.mulf %171, %120 : vector<2x32xf32>
    %182 = arith.addf %180, %181 : vector<2x32xf32>
    %cst_46 = arith.constant dense<0.000000e+00> : vector<2x192xf32>
    %183 = tpu.matmul %152, %9, %cst_46 {dimension_numbers = #tpu.dot_dimension_numbers<[1], [0], [0], [1], [0, 0, 1, 1], [], []>} : vector<2x32xf32>, vector<32x192xf32>, vector<2x192xf32> -> vector<2x192xf32>
    %cst_47 = arith.constant dense<0.000000e+00> : vector<2x192xf32>
    %184 = tpu.matmul %182, %11, %cst_47 {dimension_numbers = #tpu.dot_dimension_numbers<[1], [0], [0], [1], [0, 0, 1, 1], [], []>} : vector<2x32xf32>, vector<32x192xf32>, vector<2x192xf32> -> vector<2x192xf32>
    %185 = vector.extract_strided_slice %7 {offsets = [3, 0, 0], sizes = [1, 2, 96], strides = [1, 1, 1]} : vector<8x2x96xf32> to vector<1x2x96xf32>
    %186 = vector.shape_cast %185 : vector<1x2x96xf32> to vector<2x96xf32>
    %187 = vector.extract_strided_slice %183 {offsets = [0, 0], sizes = [2, 96], strides = [1, 1]} : vector<2x192xf32> to vector<2x96xf32>
    %188 = vector.extract_strided_slice %186 {offsets = [0, 0], sizes = [2, 32], strides = [1, 1]} : vector<2x96xf32> to vector<2x32xf32>
    %189 = vector.extract_strided_slice %187 {offsets = [0, 0], sizes = [2, 32], strides = [1, 1]} : vector<2x96xf32> to vector<2x32xf32>
    %190 = arith.addf %188, %189 : vector<2x32xf32>
    %191 = arith.negf %190 : vector<2x32xf32>
    %192 = math.exp %191 : vector<2x32xf32>
    %cst_48 = arith.constant 1.000000e+00 : f32
    %193 = vector.broadcast %cst_48 : f32 to vector<2x32xf32>
    %194 = arith.addf %193, %192 : vector<2x32xf32>
    %195 = arith.divf %193, %194 : vector<2x32xf32>
    %196 = vector.extract_strided_slice %186 {offsets = [0, 32], sizes = [2, 32], strides = [1, 1]} : vector<2x96xf32> to vector<2x32xf32>
    %197 = vector.extract_strided_slice %187 {offsets = [0, 32], sizes = [2, 32], strides = [1, 1]} : vector<2x96xf32> to vector<2x32xf32>
    %198 = arith.addf %196, %197 : vector<2x32xf32>
    %199 = arith.negf %198 : vector<2x32xf32>
    %200 = math.exp %199 : vector<2x32xf32>
    %cst_49 = arith.constant 1.000000e+00 : f32
    %201 = vector.broadcast %cst_49 : f32 to vector<2x32xf32>
    %202 = arith.addf %201, %200 : vector<2x32xf32>
    %203 = arith.divf %201, %202 : vector<2x32xf32>
    %204 = vector.extract_strided_slice %186 {offsets = [0, 64], sizes = [2, 32], strides = [1, 1]} : vector<2x96xf32> to vector<2x32xf32>
    %205 = vector.extract_strided_slice %187 {offsets = [0, 64], sizes = [2, 32], strides = [1, 1]} : vector<2x96xf32> to vector<2x32xf32>
    %206 = arith.addf %205, %19 : vector<2x32xf32>
    %207 = arith.mulf %195, %206 : vector<2x32xf32>
    %208 = arith.addf %204, %207 : vector<2x32xf32>
    %209 = math.tanh %208 : vector<2x32xf32>
    %cst_50 = arith.constant 1.000000e+00 : f32
    %210 = vector.broadcast %cst_50 : f32 to vector<2x32xf32>
    %211 = arith.subf %210, %203 : vector<2x32xf32>
    %212 = arith.mulf %211, %209 : vector<2x32xf32>
    %213 = arith.mulf %203, %152 : vector<2x32xf32>
    %214 = arith.addf %212, %213 : vector<2x32xf32>
    %215 = vector.extract_strided_slice %183 {offsets = [0, 96], sizes = [2, 96], strides = [1, 1]} : vector<2x192xf32> to vector<2x96xf32>
    %216 = arith.addf %215, %15 : vector<2x96xf32>
    %217 = vector.extract_strided_slice %184 {offsets = [0, 0], sizes = [2, 96], strides = [1, 1]} : vector<2x192xf32> to vector<2x96xf32>
    %218 = vector.extract_strided_slice %216 {offsets = [0, 0], sizes = [2, 32], strides = [1, 1]} : vector<2x96xf32> to vector<2x32xf32>
    %219 = vector.extract_strided_slice %217 {offsets = [0, 0], sizes = [2, 32], strides = [1, 1]} : vector<2x96xf32> to vector<2x32xf32>
    %220 = arith.addf %218, %219 : vector<2x32xf32>
    %221 = arith.negf %220 : vector<2x32xf32>
    %222 = math.exp %221 : vector<2x32xf32>
    %cst_51 = arith.constant 1.000000e+00 : f32
    %223 = vector.broadcast %cst_51 : f32 to vector<2x32xf32>
    %224 = arith.addf %223, %222 : vector<2x32xf32>
    %225 = arith.divf %223, %224 : vector<2x32xf32>
    %226 = vector.extract_strided_slice %216 {offsets = [0, 32], sizes = [2, 32], strides = [1, 1]} : vector<2x96xf32> to vector<2x32xf32>
    %227 = vector.extract_strided_slice %217 {offsets = [0, 32], sizes = [2, 32], strides = [1, 1]} : vector<2x96xf32> to vector<2x32xf32>
    %228 = arith.addf %226, %227 : vector<2x32xf32>
    %229 = arith.negf %228 : vector<2x32xf32>
    %230 = math.exp %229 : vector<2x32xf32>
    %cst_52 = arith.constant 1.000000e+00 : f32
    %231 = vector.broadcast %cst_52 : f32 to vector<2x32xf32>
    %232 = arith.addf %231, %230 : vector<2x32xf32>
    %233 = arith.divf %231, %232 : vector<2x32xf32>
    %234 = vector.extract_strided_slice %216 {offsets = [0, 64], sizes = [2, 32], strides = [1, 1]} : vector<2x96xf32> to vector<2x32xf32>
    %235 = vector.extract_strided_slice %217 {offsets = [0, 64], sizes = [2, 32], strides = [1, 1]} : vector<2x96xf32> to vector<2x32xf32>
    %236 = arith.addf %235, %23 : vector<2x32xf32>
    %237 = arith.mulf %225, %236 : vector<2x32xf32>
    %238 = arith.addf %234, %237 : vector<2x32xf32>
    %239 = math.tanh %238 : vector<2x32xf32>
    %cst_53 = arith.constant 1.000000e+00 : f32
    %240 = vector.broadcast %cst_53 : f32 to vector<2x32xf32>
    %241 = arith.subf %240, %233 : vector<2x32xf32>
    %242 = arith.mulf %241, %239 : vector<2x32xf32>
    %243 = arith.mulf %233, %182 : vector<2x32xf32>
    %244 = arith.addf %242, %243 : vector<2x32xf32>
    %cst_54 = arith.constant dense<0.000000e+00> : vector<2x192xf32>
    %245 = tpu.matmul %214, %9, %cst_54 {dimension_numbers = #tpu.dot_dimension_numbers<[1], [0], [0], [1], [0, 0, 1, 1], [], []>} : vector<2x32xf32>, vector<32x192xf32>, vector<2x192xf32> -> vector<2x192xf32>
    %cst_55 = arith.constant dense<0.000000e+00> : vector<2x192xf32>
    %246 = tpu.matmul %244, %11, %cst_55 {dimension_numbers = #tpu.dot_dimension_numbers<[1], [0], [0], [1], [0, 0, 1, 1], [], []>} : vector<2x32xf32>, vector<32x192xf32>, vector<2x192xf32> -> vector<2x192xf32>
    %247 = vector.extract_strided_slice %7 {offsets = [4, 0, 0], sizes = [1, 2, 96], strides = [1, 1, 1]} : vector<8x2x96xf32> to vector<1x2x96xf32>
    %248 = vector.shape_cast %247 : vector<1x2x96xf32> to vector<2x96xf32>
    %249 = vector.extract_strided_slice %245 {offsets = [0, 0], sizes = [2, 96], strides = [1, 1]} : vector<2x192xf32> to vector<2x96xf32>
    %250 = vector.extract_strided_slice %248 {offsets = [0, 0], sizes = [2, 32], strides = [1, 1]} : vector<2x96xf32> to vector<2x32xf32>
    %251 = vector.extract_strided_slice %249 {offsets = [0, 0], sizes = [2, 32], strides = [1, 1]} : vector<2x96xf32> to vector<2x32xf32>
    %252 = arith.addf %250, %251 : vector<2x32xf32>
    %253 = arith.negf %252 : vector<2x32xf32>
    %254 = math.exp %253 : vector<2x32xf32>
    %cst_56 = arith.constant 1.000000e+00 : f32
    %255 = vector.broadcast %cst_56 : f32 to vector<2x32xf32>
    %256 = arith.addf %255, %254 : vector<2x32xf32>
    %257 = arith.divf %255, %256 : vector<2x32xf32>
    %258 = vector.extract_strided_slice %248 {offsets = [0, 32], sizes = [2, 32], strides = [1, 1]} : vector<2x96xf32> to vector<2x32xf32>
    %259 = vector.extract_strided_slice %249 {offsets = [0, 32], sizes = [2, 32], strides = [1, 1]} : vector<2x96xf32> to vector<2x32xf32>
    %260 = arith.addf %258, %259 : vector<2x32xf32>
    %261 = arith.negf %260 : vector<2x32xf32>
    %262 = math.exp %261 : vector<2x32xf32>
    %cst_57 = arith.constant 1.000000e+00 : f32
    %263 = vector.broadcast %cst_57 : f32 to vector<2x32xf32>
    %264 = arith.addf %263, %262 : vector<2x32xf32>
    %265 = arith.divf %263, %264 : vector<2x32xf32>
    %266 = vector.extract_strided_slice %248 {offsets = [0, 64], sizes = [2, 32], strides = [1, 1]} : vector<2x96xf32> to vector<2x32xf32>
    %267 = vector.extract_strided_slice %249 {offsets = [0, 64], sizes = [2, 32], strides = [1, 1]} : vector<2x96xf32> to vector<2x32xf32>
    %268 = arith.addf %267, %19 : vector<2x32xf32>
    %269 = arith.mulf %257, %268 : vector<2x32xf32>
    %270 = arith.addf %266, %269 : vector<2x32xf32>
    %271 = math.tanh %270 : vector<2x32xf32>
    %cst_58 = arith.constant 1.000000e+00 : f32
    %272 = vector.broadcast %cst_58 : f32 to vector<2x32xf32>
    %273 = arith.subf %272, %265 : vector<2x32xf32>
    %274 = arith.mulf %273, %271 : vector<2x32xf32>
    %275 = arith.mulf %265, %214 : vector<2x32xf32>
    %276 = arith.addf %274, %275 : vector<2x32xf32>
    %277 = vector.extract_strided_slice %245 {offsets = [0, 96], sizes = [2, 96], strides = [1, 1]} : vector<2x192xf32> to vector<2x96xf32>
    %278 = arith.addf %277, %15 : vector<2x96xf32>
    %279 = vector.extract_strided_slice %246 {offsets = [0, 0], sizes = [2, 96], strides = [1, 1]} : vector<2x192xf32> to vector<2x96xf32>
    %280 = vector.extract_strided_slice %278 {offsets = [0, 0], sizes = [2, 32], strides = [1, 1]} : vector<2x96xf32> to vector<2x32xf32>
    %281 = vector.extract_strided_slice %279 {offsets = [0, 0], sizes = [2, 32], strides = [1, 1]} : vector<2x96xf32> to vector<2x32xf32>
    %282 = arith.addf %280, %281 : vector<2x32xf32>
    %283 = arith.negf %282 : vector<2x32xf32>
    %284 = math.exp %283 : vector<2x32xf32>
    %cst_59 = arith.constant 1.000000e+00 : f32
    %285 = vector.broadcast %cst_59 : f32 to vector<2x32xf32>
    %286 = arith.addf %285, %284 : vector<2x32xf32>
    %287 = arith.divf %285, %286 : vector<2x32xf32>
    %288 = vector.extract_strided_slice %278 {offsets = [0, 32], sizes = [2, 32], strides = [1, 1]} : vector<2x96xf32> to vector<2x32xf32>
    %289 = vector.extract_strided_slice %279 {offsets = [0, 32], sizes = [2, 32], strides = [1, 1]} : vector<2x96xf32> to vector<2x32xf32>
    %290 = arith.addf %288, %289 : vector<2x32xf32>
    %291 = arith.negf %290 : vector<2x32xf32>
    %292 = math.exp %291 : vector<2x32xf32>
    %cst_60 = arith.constant 1.000000e+00 : f32
    %293 = vector.broadcast %cst_60 : f32 to vector<2x32xf32>
    %294 = arith.addf %293, %292 : vector<2x32xf32>
    %295 = arith.divf %293, %294 : vector<2x32xf32>
    %296 = vector.extract_strided_slice %278 {offsets = [0, 64], sizes = [2, 32], strides = [1, 1]} : vector<2x96xf32> to vector<2x32xf32>
    %297 = vector.extract_strided_slice %279 {offsets = [0, 64], sizes = [2, 32], strides = [1, 1]} : vector<2x96xf32> to vector<2x32xf32>
    %298 = arith.addf %297, %23 : vector<2x32xf32>
    %299 = arith.mulf %287, %298 : vector<2x32xf32>
    %300 = arith.addf %296, %299 : vector<2x32xf32>
    %301 = math.tanh %300 : vector<2x32xf32>
    %cst_61 = arith.constant 1.000000e+00 : f32
    %302 = vector.broadcast %cst_61 : f32 to vector<2x32xf32>
    %303 = arith.subf %302, %295 : vector<2x32xf32>
    %304 = arith.mulf %303, %301 : vector<2x32xf32>
    %305 = arith.mulf %295, %244 : vector<2x32xf32>
    %306 = arith.addf %304, %305 : vector<2x32xf32>
    %cst_62 = arith.constant dense<0.000000e+00> : vector<2x192xf32>
    %307 = tpu.matmul %276, %9, %cst_62 {dimension_numbers = #tpu.dot_dimension_numbers<[1], [0], [0], [1], [0, 0, 1, 1], [], []>} : vector<2x32xf32>, vector<32x192xf32>, vector<2x192xf32> -> vector<2x192xf32>
    %cst_63 = arith.constant dense<0.000000e+00> : vector<2x192xf32>
    %308 = tpu.matmul %306, %11, %cst_63 {dimension_numbers = #tpu.dot_dimension_numbers<[1], [0], [0], [1], [0, 0, 1, 1], [], []>} : vector<2x32xf32>, vector<32x192xf32>, vector<2x192xf32> -> vector<2x192xf32>
    %309 = vector.extract_strided_slice %7 {offsets = [5, 0, 0], sizes = [1, 2, 96], strides = [1, 1, 1]} : vector<8x2x96xf32> to vector<1x2x96xf32>
    %310 = vector.shape_cast %309 : vector<1x2x96xf32> to vector<2x96xf32>
    %311 = vector.extract_strided_slice %307 {offsets = [0, 0], sizes = [2, 96], strides = [1, 1]} : vector<2x192xf32> to vector<2x96xf32>
    %312 = vector.extract_strided_slice %310 {offsets = [0, 0], sizes = [2, 32], strides = [1, 1]} : vector<2x96xf32> to vector<2x32xf32>
    %313 = vector.extract_strided_slice %311 {offsets = [0, 0], sizes = [2, 32], strides = [1, 1]} : vector<2x96xf32> to vector<2x32xf32>
    %314 = arith.addf %312, %313 : vector<2x32xf32>
    %315 = arith.negf %314 : vector<2x32xf32>
    %316 = math.exp %315 : vector<2x32xf32>
    %cst_64 = arith.constant 1.000000e+00 : f32
    %317 = vector.broadcast %cst_64 : f32 to vector<2x32xf32>
    %318 = arith.addf %317, %316 : vector<2x32xf32>
    %319 = arith.divf %317, %318 : vector<2x32xf32>
    %320 = vector.extract_strided_slice %310 {offsets = [0, 32], sizes = [2, 32], strides = [1, 1]} : vector<2x96xf32> to vector<2x32xf32>
    %321 = vector.extract_strided_slice %311 {offsets = [0, 32], sizes = [2, 32], strides = [1, 1]} : vector<2x96xf32> to vector<2x32xf32>
    %322 = arith.addf %320, %321 : vector<2x32xf32>
    %323 = arith.negf %322 : vector<2x32xf32>
    %324 = math.exp %323 : vector<2x32xf32>
    %cst_65 = arith.constant 1.000000e+00 : f32
    %325 = vector.broadcast %cst_65 : f32 to vector<2x32xf32>
    %326 = arith.addf %325, %324 : vector<2x32xf32>
    %327 = arith.divf %325, %326 : vector<2x32xf32>
    %328 = vector.extract_strided_slice %310 {offsets = [0, 64], sizes = [2, 32], strides = [1, 1]} : vector<2x96xf32> to vector<2x32xf32>
    %329 = vector.extract_strided_slice %311 {offsets = [0, 64], sizes = [2, 32], strides = [1, 1]} : vector<2x96xf32> to vector<2x32xf32>
    %330 = arith.addf %329, %19 : vector<2x32xf32>
    %331 = arith.mulf %319, %330 : vector<2x32xf32>
    %332 = arith.addf %328, %331 : vector<2x32xf32>
    %333 = math.tanh %332 : vector<2x32xf32>
    %cst_66 = arith.constant 1.000000e+00 : f32
    %334 = vector.broadcast %cst_66 : f32 to vector<2x32xf32>
    %335 = arith.subf %334, %327 : vector<2x32xf32>
    %336 = arith.mulf %335, %333 : vector<2x32xf32>
    %337 = arith.mulf %327, %276 : vector<2x32xf32>
    %338 = arith.addf %336, %337 : vector<2x32xf32>
    %339 = vector.extract_strided_slice %307 {offsets = [0, 96], sizes = [2, 96], strides = [1, 1]} : vector<2x192xf32> to vector<2x96xf32>
    %340 = arith.addf %339, %15 : vector<2x96xf32>
    %341 = vector.extract_strided_slice %308 {offsets = [0, 0], sizes = [2, 96], strides = [1, 1]} : vector<2x192xf32> to vector<2x96xf32>
    %342 = vector.extract_strided_slice %340 {offsets = [0, 0], sizes = [2, 32], strides = [1, 1]} : vector<2x96xf32> to vector<2x32xf32>
    %343 = vector.extract_strided_slice %341 {offsets = [0, 0], sizes = [2, 32], strides = [1, 1]} : vector<2x96xf32> to vector<2x32xf32>
    %344 = arith.addf %342, %343 : vector<2x32xf32>
    %345 = arith.negf %344 : vector<2x32xf32>
    %346 = math.exp %345 : vector<2x32xf32>
    %cst_67 = arith.constant 1.000000e+00 : f32
    %347 = vector.broadcast %cst_67 : f32 to vector<2x32xf32>
    %348 = arith.addf %347, %346 : vector<2x32xf32>
    %349 = arith.divf %347, %348 : vector<2x32xf32>
    %350 = vector.extract_strided_slice %340 {offsets = [0, 32], sizes = [2, 32], strides = [1, 1]} : vector<2x96xf32> to vector<2x32xf32>
    %351 = vector.extract_strided_slice %341 {offsets = [0, 32], sizes = [2, 32], strides = [1, 1]} : vector<2x96xf32> to vector<2x32xf32>
    %352 = arith.addf %350, %351 : vector<2x32xf32>
    %353 = arith.negf %352 : vector<2x32xf32>
    %354 = math.exp %353 : vector<2x32xf32>
    %cst_68 = arith.constant 1.000000e+00 : f32
    %355 = vector.broadcast %cst_68 : f32 to vector<2x32xf32>
    %356 = arith.addf %355, %354 : vector<2x32xf32>
    %357 = arith.divf %355, %356 : vector<2x32xf32>
    %358 = vector.extract_strided_slice %340 {offsets = [0, 64], sizes = [2, 32], strides = [1, 1]} : vector<2x96xf32> to vector<2x32xf32>
    %359 = vector.extract_strided_slice %341 {offsets = [0, 64], sizes = [2, 32], strides = [1, 1]} : vector<2x96xf32> to vector<2x32xf32>
    %360 = arith.addf %359, %23 : vector<2x32xf32>
    %361 = arith.mulf %349, %360 : vector<2x32xf32>
    %362 = arith.addf %358, %361 : vector<2x32xf32>
    %363 = math.tanh %362 : vector<2x32xf32>
    %cst_69 = arith.constant 1.000000e+00 : f32
    %364 = vector.broadcast %cst_69 : f32 to vector<2x32xf32>
    %365 = arith.subf %364, %357 : vector<2x32xf32>
    %366 = arith.mulf %365, %363 : vector<2x32xf32>
    %367 = arith.mulf %357, %306 : vector<2x32xf32>
    %368 = arith.addf %366, %367 : vector<2x32xf32>
    %cst_70 = arith.constant dense<0.000000e+00> : vector<2x192xf32>
    %369 = tpu.matmul %338, %9, %cst_70 {dimension_numbers = #tpu.dot_dimension_numbers<[1], [0], [0], [1], [0, 0, 1, 1], [], []>} : vector<2x32xf32>, vector<32x192xf32>, vector<2x192xf32> -> vector<2x192xf32>
    %cst_71 = arith.constant dense<0.000000e+00> : vector<2x192xf32>
    %370 = tpu.matmul %368, %11, %cst_71 {dimension_numbers = #tpu.dot_dimension_numbers<[1], [0], [0], [1], [0, 0, 1, 1], [], []>} : vector<2x32xf32>, vector<32x192xf32>, vector<2x192xf32> -> vector<2x192xf32>
    %371 = vector.extract_strided_slice %7 {offsets = [6, 0, 0], sizes = [1, 2, 96], strides = [1, 1, 1]} : vector<8x2x96xf32> to vector<1x2x96xf32>
    %372 = vector.shape_cast %371 : vector<1x2x96xf32> to vector<2x96xf32>
    %373 = vector.extract_strided_slice %369 {offsets = [0, 0], sizes = [2, 96], strides = [1, 1]} : vector<2x192xf32> to vector<2x96xf32>
    %374 = vector.extract_strided_slice %372 {offsets = [0, 0], sizes = [2, 32], strides = [1, 1]} : vector<2x96xf32> to vector<2x32xf32>
    %375 = vector.extract_strided_slice %373 {offsets = [0, 0], sizes = [2, 32], strides = [1, 1]} : vector<2x96xf32> to vector<2x32xf32>
    %376 = arith.addf %374, %375 : vector<2x32xf32>
    %377 = arith.negf %376 : vector<2x32xf32>
    %378 = math.exp %377 : vector<2x32xf32>
    %cst_72 = arith.constant 1.000000e+00 : f32
    %379 = vector.broadcast %cst_72 : f32 to vector<2x32xf32>
    %380 = arith.addf %379, %378 : vector<2x32xf32>
    %381 = arith.divf %379, %380 : vector<2x32xf32>
    %382 = vector.extract_strided_slice %372 {offsets = [0, 32], sizes = [2, 32], strides = [1, 1]} : vector<2x96xf32> to vector<2x32xf32>
    %383 = vector.extract_strided_slice %373 {offsets = [0, 32], sizes = [2, 32], strides = [1, 1]} : vector<2x96xf32> to vector<2x32xf32>
    %384 = arith.addf %382, %383 : vector<2x32xf32>
    %385 = arith.negf %384 : vector<2x32xf32>
    %386 = math.exp %385 : vector<2x32xf32>
    %cst_73 = arith.constant 1.000000e+00 : f32
    %387 = vector.broadcast %cst_73 : f32 to vector<2x32xf32>
    %388 = arith.addf %387, %386 : vector<2x32xf32>
    %389 = arith.divf %387, %388 : vector<2x32xf32>
    %390 = vector.extract_strided_slice %372 {offsets = [0, 64], sizes = [2, 32], strides = [1, 1]} : vector<2x96xf32> to vector<2x32xf32>
    %391 = vector.extract_strided_slice %373 {offsets = [0, 64], sizes = [2, 32], strides = [1, 1]} : vector<2x96xf32> to vector<2x32xf32>
    %392 = arith.addf %391, %19 : vector<2x32xf32>
    %393 = arith.mulf %381, %392 : vector<2x32xf32>
    %394 = arith.addf %390, %393 : vector<2x32xf32>
    %395 = math.tanh %394 : vector<2x32xf32>
    %cst_74 = arith.constant 1.000000e+00 : f32
    %396 = vector.broadcast %cst_74 : f32 to vector<2x32xf32>
    %397 = arith.subf %396, %389 : vector<2x32xf32>
    %398 = arith.mulf %397, %395 : vector<2x32xf32>
    %399 = arith.mulf %389, %338 : vector<2x32xf32>
    %400 = arith.addf %398, %399 : vector<2x32xf32>
    %401 = vector.extract_strided_slice %369 {offsets = [0, 96], sizes = [2, 96], strides = [1, 1]} : vector<2x192xf32> to vector<2x96xf32>
    %402 = arith.addf %401, %15 : vector<2x96xf32>
    %403 = vector.extract_strided_slice %370 {offsets = [0, 0], sizes = [2, 96], strides = [1, 1]} : vector<2x192xf32> to vector<2x96xf32>
    %404 = vector.extract_strided_slice %402 {offsets = [0, 0], sizes = [2, 32], strides = [1, 1]} : vector<2x96xf32> to vector<2x32xf32>
    %405 = vector.extract_strided_slice %403 {offsets = [0, 0], sizes = [2, 32], strides = [1, 1]} : vector<2x96xf32> to vector<2x32xf32>
    %406 = arith.addf %404, %405 : vector<2x32xf32>
    %407 = arith.negf %406 : vector<2x32xf32>
    %408 = math.exp %407 : vector<2x32xf32>
    %cst_75 = arith.constant 1.000000e+00 : f32
    %409 = vector.broadcast %cst_75 : f32 to vector<2x32xf32>
    %410 = arith.addf %409, %408 : vector<2x32xf32>
    %411 = arith.divf %409, %410 : vector<2x32xf32>
    %412 = vector.extract_strided_slice %402 {offsets = [0, 32], sizes = [2, 32], strides = [1, 1]} : vector<2x96xf32> to vector<2x32xf32>
    %413 = vector.extract_strided_slice %403 {offsets = [0, 32], sizes = [2, 32], strides = [1, 1]} : vector<2x96xf32> to vector<2x32xf32>
    %414 = arith.addf %412, %413 : vector<2x32xf32>
    %415 = arith.negf %414 : vector<2x32xf32>
    %416 = math.exp %415 : vector<2x32xf32>
    %cst_76 = arith.constant 1.000000e+00 : f32
    %417 = vector.broadcast %cst_76 : f32 to vector<2x32xf32>
    %418 = arith.addf %417, %416 : vector<2x32xf32>
    %419 = arith.divf %417, %418 : vector<2x32xf32>
    %420 = vector.extract_strided_slice %402 {offsets = [0, 64], sizes = [2, 32], strides = [1, 1]} : vector<2x96xf32> to vector<2x32xf32>
    %421 = vector.extract_strided_slice %403 {offsets = [0, 64], sizes = [2, 32], strides = [1, 1]} : vector<2x96xf32> to vector<2x32xf32>
    %422 = arith.addf %421, %23 : vector<2x32xf32>
    %423 = arith.mulf %411, %422 : vector<2x32xf32>
    %424 = arith.addf %420, %423 : vector<2x32xf32>
    %425 = math.tanh %424 : vector<2x32xf32>
    %cst_77 = arith.constant 1.000000e+00 : f32
    %426 = vector.broadcast %cst_77 : f32 to vector<2x32xf32>
    %427 = arith.subf %426, %419 : vector<2x32xf32>
    %428 = arith.mulf %427, %425 : vector<2x32xf32>
    %429 = arith.mulf %419, %368 : vector<2x32xf32>
    %430 = arith.addf %428, %429 : vector<2x32xf32>
    %cst_78 = arith.constant dense<0.000000e+00> : vector<2x192xf32>
    %431 = tpu.matmul %400, %9, %cst_78 {dimension_numbers = #tpu.dot_dimension_numbers<[1], [0], [0], [1], [0, 0, 1, 1], [], []>} : vector<2x32xf32>, vector<32x192xf32>, vector<2x192xf32> -> vector<2x192xf32>
    %cst_79 = arith.constant dense<0.000000e+00> : vector<2x192xf32>
    %432 = tpu.matmul %430, %11, %cst_79 {dimension_numbers = #tpu.dot_dimension_numbers<[1], [0], [0], [1], [0, 0, 1, 1], [], []>} : vector<2x32xf32>, vector<32x192xf32>, vector<2x192xf32> -> vector<2x192xf32>
    %433 = vector.extract_strided_slice %7 {offsets = [7, 0, 0], sizes = [1, 2, 96], strides = [1, 1, 1]} : vector<8x2x96xf32> to vector<1x2x96xf32>
    %434 = vector.shape_cast %433 : vector<1x2x96xf32> to vector<2x96xf32>
    %435 = vector.extract_strided_slice %431 {offsets = [0, 0], sizes = [2, 96], strides = [1, 1]} : vector<2x192xf32> to vector<2x96xf32>
    %436 = vector.extract_strided_slice %434 {offsets = [0, 0], sizes = [2, 32], strides = [1, 1]} : vector<2x96xf32> to vector<2x32xf32>
    %437 = vector.extract_strided_slice %435 {offsets = [0, 0], sizes = [2, 32], strides = [1, 1]} : vector<2x96xf32> to vector<2x32xf32>
    %438 = arith.addf %436, %437 : vector<2x32xf32>
    %439 = arith.negf %438 : vector<2x32xf32>
    %440 = math.exp %439 : vector<2x32xf32>
    %cst_80 = arith.constant 1.000000e+00 : f32
    %441 = vector.broadcast %cst_80 : f32 to vector<2x32xf32>
    %442 = arith.addf %441, %440 : vector<2x32xf32>
    %443 = arith.divf %441, %442 : vector<2x32xf32>
    %444 = vector.extract_strided_slice %434 {offsets = [0, 32], sizes = [2, 32], strides = [1, 1]} : vector<2x96xf32> to vector<2x32xf32>
    %445 = vector.extract_strided_slice %435 {offsets = [0, 32], sizes = [2, 32], strides = [1, 1]} : vector<2x96xf32> to vector<2x32xf32>
    %446 = arith.addf %444, %445 : vector<2x32xf32>
    %447 = arith.negf %446 : vector<2x32xf32>
    %448 = math.exp %447 : vector<2x32xf32>
    %cst_81 = arith.constant 1.000000e+00 : f32
    %449 = vector.broadcast %cst_81 : f32 to vector<2x32xf32>
    %450 = arith.addf %449, %448 : vector<2x32xf32>
    %451 = arith.divf %449, %450 : vector<2x32xf32>
    %452 = vector.extract_strided_slice %434 {offsets = [0, 64], sizes = [2, 32], strides = [1, 1]} : vector<2x96xf32> to vector<2x32xf32>
    %453 = vector.extract_strided_slice %435 {offsets = [0, 64], sizes = [2, 32], strides = [1, 1]} : vector<2x96xf32> to vector<2x32xf32>
    %454 = arith.addf %453, %19 : vector<2x32xf32>
    %455 = arith.mulf %443, %454 : vector<2x32xf32>
    %456 = arith.addf %452, %455 : vector<2x32xf32>
    %457 = math.tanh %456 : vector<2x32xf32>
    %cst_82 = arith.constant 1.000000e+00 : f32
    %458 = vector.broadcast %cst_82 : f32 to vector<2x32xf32>
    %459 = arith.subf %458, %451 : vector<2x32xf32>
    %460 = arith.mulf %459, %457 : vector<2x32xf32>
    %461 = arith.mulf %451, %400 : vector<2x32xf32>
    %462 = arith.addf %460, %461 : vector<2x32xf32>
    %463 = vector.extract_strided_slice %431 {offsets = [0, 96], sizes = [2, 96], strides = [1, 1]} : vector<2x192xf32> to vector<2x96xf32>
    %464 = arith.addf %463, %15 : vector<2x96xf32>
    %465 = vector.extract_strided_slice %432 {offsets = [0, 0], sizes = [2, 96], strides = [1, 1]} : vector<2x192xf32> to vector<2x96xf32>
    %466 = vector.extract_strided_slice %464 {offsets = [0, 0], sizes = [2, 32], strides = [1, 1]} : vector<2x96xf32> to vector<2x32xf32>
    %467 = vector.extract_strided_slice %465 {offsets = [0, 0], sizes = [2, 32], strides = [1, 1]} : vector<2x96xf32> to vector<2x32xf32>
    %468 = arith.addf %466, %467 : vector<2x32xf32>
    %469 = arith.negf %468 : vector<2x32xf32>
    %470 = math.exp %469 : vector<2x32xf32>
    %cst_83 = arith.constant 1.000000e+00 : f32
    %471 = vector.broadcast %cst_83 : f32 to vector<2x32xf32>
    %472 = arith.addf %471, %470 : vector<2x32xf32>
    %473 = arith.divf %471, %472 : vector<2x32xf32>
    %474 = vector.extract_strided_slice %464 {offsets = [0, 32], sizes = [2, 32], strides = [1, 1]} : vector<2x96xf32> to vector<2x32xf32>
    %475 = vector.extract_strided_slice %465 {offsets = [0, 32], sizes = [2, 32], strides = [1, 1]} : vector<2x96xf32> to vector<2x32xf32>
    %476 = arith.addf %474, %475 : vector<2x32xf32>
    %477 = arith.negf %476 : vector<2x32xf32>
    %478 = math.exp %477 : vector<2x32xf32>
    %cst_84 = arith.constant 1.000000e+00 : f32
    %479 = vector.broadcast %cst_84 : f32 to vector<2x32xf32>
    %480 = arith.addf %479, %478 : vector<2x32xf32>
    %481 = arith.divf %479, %480 : vector<2x32xf32>
    %482 = vector.extract_strided_slice %464 {offsets = [0, 64], sizes = [2, 32], strides = [1, 1]} : vector<2x96xf32> to vector<2x32xf32>
    %483 = vector.extract_strided_slice %465 {offsets = [0, 64], sizes = [2, 32], strides = [1, 1]} : vector<2x96xf32> to vector<2x32xf32>
    %484 = arith.addf %483, %23 : vector<2x32xf32>
    %485 = arith.mulf %473, %484 : vector<2x32xf32>
    %486 = arith.addf %482, %485 : vector<2x32xf32>
    %487 = math.tanh %486 : vector<2x32xf32>
    %cst_85 = arith.constant 1.000000e+00 : f32
    %488 = vector.broadcast %cst_85 : f32 to vector<2x32xf32>
    %489 = arith.subf %488, %481 : vector<2x32xf32>
    %490 = arith.mulf %489, %487 : vector<2x32xf32>
    %491 = arith.mulf %481, %430 : vector<2x32xf32>
    %492 = arith.addf %490, %491 : vector<2x32xf32>
    %cst_86 = arith.constant dense<0.000000e+00> : vector<2x192xf32>
    %493 = tpu.matmul %462, %9, %cst_86 {dimension_numbers = #tpu.dot_dimension_numbers<[1], [0], [0], [1], [0, 0, 1, 1], [], []>} : vector<2x32xf32>, vector<32x192xf32>, vector<2x192xf32> -> vector<2x192xf32>
    %cst_87 = arith.constant dense<0.000000e+00> : vector<2x192xf32>
    %494 = tpu.matmul %492, %11, %cst_87 {dimension_numbers = #tpu.dot_dimension_numbers<[1], [0], [0], [1], [0, 0, 1, 1], [], []>} : vector<2x32xf32>, vector<32x192xf32>, vector<2x192xf32> -> vector<2x192xf32>
    %495 = vector.extract_strided_slice %493 {offsets = [0, 96], sizes = [2, 96], strides = [1, 1]} : vector<2x192xf32> to vector<2x96xf32>
    %496 = arith.addf %495, %15 : vector<2x96xf32>
    %497 = vector.extract_strided_slice %494 {offsets = [0, 0], sizes = [2, 96], strides = [1, 1]} : vector<2x192xf32> to vector<2x96xf32>
    %498 = vector.extract_strided_slice %496 {offsets = [0, 0], sizes = [2, 32], strides = [1, 1]} : vector<2x96xf32> to vector<2x32xf32>
    %499 = vector.extract_strided_slice %497 {offsets = [0, 0], sizes = [2, 32], strides = [1, 1]} : vector<2x96xf32> to vector<2x32xf32>
    %500 = arith.addf %498, %499 : vector<2x32xf32>
    %501 = arith.negf %500 : vector<2x32xf32>
    %502 = math.exp %501 : vector<2x32xf32>
    %cst_88 = arith.constant 1.000000e+00 : f32
    %503 = vector.broadcast %cst_88 : f32 to vector<2x32xf32>
    %504 = arith.addf %503, %502 : vector<2x32xf32>
    %505 = arith.divf %503, %504 : vector<2x32xf32>
    %506 = vector.extract_strided_slice %496 {offsets = [0, 32], sizes = [2, 32], strides = [1, 1]} : vector<2x96xf32> to vector<2x32xf32>
    %507 = vector.extract_strided_slice %497 {offsets = [0, 32], sizes = [2, 32], strides = [1, 1]} : vector<2x96xf32> to vector<2x32xf32>
    %508 = arith.addf %506, %507 : vector<2x32xf32>
    %509 = arith.negf %508 : vector<2x32xf32>
    %510 = math.exp %509 : vector<2x32xf32>
    %cst_89 = arith.constant 1.000000e+00 : f32
    %511 = vector.broadcast %cst_89 : f32 to vector<2x32xf32>
    %512 = arith.addf %511, %510 : vector<2x32xf32>
    %513 = arith.divf %511, %512 : vector<2x32xf32>
    %514 = vector.extract_strided_slice %496 {offsets = [0, 64], sizes = [2, 32], strides = [1, 1]} : vector<2x96xf32> to vector<2x32xf32>
    %515 = vector.extract_strided_slice %497 {offsets = [0, 64], sizes = [2, 32], strides = [1, 1]} : vector<2x96xf32> to vector<2x32xf32>
    %516 = arith.addf %515, %23 : vector<2x32xf32>
    %517 = arith.mulf %505, %516 : vector<2x32xf32>
    %518 = arith.addf %514, %517 : vector<2x32xf32>
    %519 = math.tanh %518 : vector<2x32xf32>
    %cst_90 = arith.constant 1.000000e+00 : f32
    %520 = vector.broadcast %cst_90 : f32 to vector<2x32xf32>
    %521 = arith.subf %520, %513 : vector<2x32xf32>
    %522 = arith.mulf %521, %519 : vector<2x32xf32>
    %523 = arith.mulf %513, %492 : vector<2x32xf32>
    %524 = arith.addf %522, %523 : vector<2x32xf32>
    %525 = tpu.concatenate %120, %182, %244, %306, %368, %430, %492, %524 in 0 : vector<2x32xf32>, vector<2x32xf32>, vector<2x32xf32>, vector<2x32xf32>, vector<2x32xf32>, vector<2x32xf32>, vector<2x32xf32>, vector<2x32xf32> -> vector<16x32xf32>
    %c0_91 = arith.constant 0 : index
    %c0_92 = arith.constant 0 : index
    %526 = vector.load %arg6[%c0_91, %c0_92] : memref<16x32xf32, #tpu.memory_space<vmem>>, vector<16x32xf32>
    tpu.vector_store %arg6[%c0_91, %c0_92], %525 {strides = array<i32>} : memref<16x32xf32, #tpu.memory_space<vmem>>, vector<16x32xf32>,
    %c0_93 = arith.constant 0 : index
    %c0_94 = arith.constant 0 : index
    %c0_95 = arith.constant 0 : index
    %527 = vector.load %arg7[%c0_93, %c0_94, %c0_95] : memref<2x2x32xf32, #tpu.memory_space<vmem>>, vector<1x2x32xf32>
    %528 = vector.shape_cast %527 : vector<1x2x32xf32> to vector<2x32xf32>
    %529 = vector.shape_cast %462 : vector<2x32xf32> to vector<1x2x32xf32>
    tpu.vector_store %arg7[%c0_93, %c0_94, %c0_95], %529 {strides = array<i32>} : memref<2x2x32xf32, #tpu.memory_space<vmem>>, vector<1x2x32xf32>,
    %c1_96 = arith.constant 1 : index
    %c0_97 = arith.constant 0 : index
    %c0_98 = arith.constant 0 : index
    %530 = vector.load %arg7[%c1_96, %c0_97, %c0_98] : memref<2x2x32xf32, #tpu.memory_space<vmem>>, vector<1x2x32xf32>
    %531 = vector.shape_cast %530 : vector<1x2x32xf32> to vector<2x32xf32>
    %532 = vector.shape_cast %524 : vector<2x32xf32> to vector<1x2x32xf32>
    tpu.vector_store %arg7[%c1_96, %c0_97, %c0_98], %532 {strides = array<i32>} : memref<2x2x32xf32, #tpu.memory_space<vmem>>, vector<1x2x32xf32>,
    return
  }
}

</mosaic_0001>

<llo_original>
// kernel: decoder_forward.1
$region0: #{decoder_forward.1}
  #allocation0 [shape = 'u32[]', space=smem, size = 0x4, offset = 0x4, fixed_abs, tag = 'smem constant byte address 0x4 - core index']
  #allocation1 [shape = 'u32[144,128]{1,0:T(1,128)}', space=vmem, size = 0x12000, scoped, tag = 'internal scratch']
  %s0 = inlined_call_operand.hbm [shape: f32[16,32], index: 0, kind: input, shape index: {}]
  %s1 = inlined_call_operand.vmem [shape: f32[2,2,32], index: 1, kind: input, shape index: {}]
  %s2 = inlined_call_operand.hbm [shape: f32[32,96], index: 2, kind: input, shape index: {}]
  %s3 = inlined_call_operand.vmem [shape: f32[2,1,96], index: 3, kind: input, shape index: {}]
  %s4 = inlined_call_operand.vmem [shape: f32[2,1,32], index: 4, kind: input, shape index: {}]
  %s5 = inlined_call_operand.hbm [shape: f32[2,32,192], index: 5, kind: input, shape index: {}]
  %s6 = inlined_call_operand.hbm [shape: f32[16,32], index: 6, kind: output, shape index: {0}]
  %s7 = inlined_call_operand.hbm [shape: f32[2,2,32], index: 7, kind: output, shape index: {1}]
  %8 = xla_tuple %s6, %s7
  %s9 = sld [smem:[#allocation0]]
  $region54: #{decoder_forward.1} parent=0
    _
  %s11 = ssub.s32 1, %s9
  %s12 = scalar_select 0, %s11, %s9
  $region1: #{decoder_forward.1} parent=0
    #allocation2 [shape = 'u8[8192]{0}', space=vmem, size = 0x2000, scoped, tag = 'input window, operand 0, single buffered']
    #allocation3 [shape = 's32[1]{0}', space=sflag, size = 0x4, scoped, tag = 'scoped memory for decoder_forward.1']
    #allocation4 [shape = 's32[1]{0}', space=sflag, size = 0x4, scoped, tag = 'scoped memory for decoder_forward.1']
    #allocation5 [shape = 'u8[16384]{0}', space=vmem, size = 0x4000, scoped, tag = 'input window, operand 2, single buffered']
    #allocation6 [shape = 's32[1]{0}', space=sflag, size = 0x4, scoped, tag = 'scoped memory for decoder_forward.1']
    #allocation7 [shape = 'u8[65536]{0}', space=vmem, size = 0x10000, scoped, tag = 'input window, operand 5, single buffered']
    #allocation8 [shape = 'u8[8192]{0}', space=vmem, size = 0x2000, scoped, tag = 'output window, operand 0, single buffered']
    #allocation9 [shape = 'u8[2048]{0}', space=vmem, size = 0x800, scoped, tag = 'output window, operand 1, single buffered']
    #allocation10 [shape = 's32[1]{0}', space=sflag, size = 0x4, scoped, tag = 'scoped memory for decoder_forward.1']
    %13 = vsyncpa [#allocation3], 0
    %14 = vsyncpa [#allocation6], 0
    %15 = vsyncpa [#allocation4], 0
    %16 = vsyncpa [#allocation10], 0
    // Predicated region
    $region2: #{decoder_forward.1} parent=1 // pred_check
      _
    $region3: #{decoder_forward.1} parent=1 // pred_check_branch
      %18 = sbr.rel (0) target = $region5
    $region4: #{decoder_forward.1} parent=1 // pred_region
      %s20 = ssub.s32 256, 256
      %21 = vsyncadd [#allocation3], %s20
      %s22 = sshll.u32 [#allocation2], 4
      %s23 = int_to_ptr.vmem [resolvable:$true] %s22
      %28 = dma.hbm_to_vmem [thread:$0]  %s0, 256, %s23, [#allocation3], 128, 128, 8
    $region5: #{decoder_forward.1} parent=1 // pred_fallthru
      _
    // Predicated region
    $region6: #{decoder_forward.1} parent=1 // pred_check
      _
    $region7: #{decoder_forward.1} parent=1 // pred_check_branch
      %30 = sbr.rel (0) target = $region9
    $region8: #{decoder_forward.1} parent=1 // pred_region
      _
    $region9: #{decoder_forward.1} parent=1 // pred_fallthru
      _
    // Predicated region
    $region10: #{decoder_forward.1} parent=1 // pred_check
      _
    $region11: #{decoder_forward.1} parent=1 // pred_check_branch
      %32 = sbr.rel (0) target = $region13
    $region12: #{decoder_forward.1} parent=1 // pred_region
      %s34 = ssub.s32 512, 512
      %35 = vsyncadd [#allocation6], %s34
      %s36 = sshll.u32 [#allocation5], 4
      %s37 = int_to_ptr.vmem [resolvable:$true] %s36
      %42 = dma.hbm_to_vmem [thread:$0]  %s2, 512, %s37, [#allocation6], 128, 128, 8
    $region13: #{decoder_forward.1} parent=1 // pred_fallthru
      _
    // Predicated region
    $region14: #{decoder_forward.1} parent=1 // pred_check
      _
    $region15: #{decoder_forward.1} parent=1 // pred_check_branch
      %44 = sbr.rel (0) target = $region17
    $region16: #{decoder_forward.1} parent=1 // pred_region
      _
    $region17: #{decoder_forward.1} parent=1 // pred_fallthru
      _
    // Predicated region
    $region18: #{decoder_forward.1} parent=1 // pred_check
      _
    $region19: #{decoder_forward.1} parent=1 // pred_check_branch
      %46 = sbr.rel (0) target = $region21
    $region20: #{decoder_forward.1} parent=1 // pred_region
      _
    $region21: #{decoder_forward.1} parent=1 // pred_fallthru
      _
    // Predicated region
    $region22: #{decoder_forward.1} parent=1 // pred_check
      _
    $region23: #{decoder_forward.1} parent=1 // pred_check_branch
      %48 = sbr.rel (0) target = $region25
    $region24: #{decoder_forward.1} parent=1 // pred_region
      %s50 = ssub.s32 2048, 2048
      %51 = vsyncadd [#allocation6], %s50
      %s52 = sshll.u32 [#allocation7], 4
      %s53 = int_to_ptr.vmem [resolvable:$true] %s52
      %58 = dma.hbm_to_vmem [thread:$0]  %s5, 2048, %s53, [#allocation6], 256, 256, 16
    $region25: #{decoder_forward.1} parent=1 // pred_fallthru
      _
    // Predicated region
    $region26: #{decoder_forward.1} parent=1 // pred_check
      _
    $region27: #{decoder_forward.1} parent=1 // pred_check_branch
      %60 = sbr.rel (0) target = $region29
    $region28: #{decoder_forward.1} parent=1 // pred_region
      %61 = dma.done [#allocation3], 256
    $region29: #{decoder_forward.1} parent=1 // pred_fallthru
      _
    // Predicated region
    $region30: #{decoder_forward.1} parent=1 // pred_check
      _
    $region31: #{decoder_forward.1} parent=1 // pred_check_branch
      %63 = sbr.rel (0) target = $region33
    $region32: #{decoder_forward.1} parent=1 // pred_region
      %64 = dma.done [#allocation6], 512
    $region33: #{decoder_forward.1} parent=1 // pred_fallthru
      _
    // Predicated region
    $region34: #{decoder_forward.1} parent=1 // pred_check
      _
    $region35: #{decoder_forward.1} parent=1 // pred_check_branch
      %66 = sbr.rel (0) target = $region37
    $region36: #{decoder_forward.1} parent=1 // pred_region
      %67 = dma.done [#allocation6], 2048
    $region37: #{decoder_forward.1} parent=1 // pred_fallthru
      _
    %v68 = vld [vmem:[#allocation2] sm:$0xff]
    %v69 = vld [vmem:[#allocation2 + $0x8] sm:$0xff]
    %v70 = vld [vmem:[#allocation5] sm:$0xff]
    %v71 = vld [vmem:[#allocation5 + $0x8] sm:$0xff]
    %v72 = vld [vmem:[#allocation5 + $0x10] sm:$0xff]
    %v73 = vld [vmem:[#allocation5 + $0x18] sm:$0xff]
    %v74 = vld [vmem:[%s3] sm:$0x1]
    %v76 = vlaneseq
    %v77 = vshrl.u32 %v76, 7
    %v78 = vsub.s32 0, %v77
    %v79 = vrot.slane %v74, %v78
    %vm81 = vcmask 261120
    %v83 = vsel %vm81, %v68, 0
    %v86 = vsel %vm81, %v69, 0
    %88 = vmatprep.subr.mxu0 0.0
    %89 = vmatpush1.msra.mxu0 %v70
    %90 = vmatprep.subr.mxu0 0.0
    %91 = vmatpush1.msra.mxu0 %v71
    %92 = vmatprep.subr.mxu0 0.0
    %93 = vmatpush1.msra.mxu0 %v72
    %94 = vmatprep.subr.mxu0 0.0
    %95 = vmatpush1.msra.mxu0 %v73
    %96 = vmatprep.subr.mxu0 0.0
    %97 = vmatpush1.msra.mxu0 0.0
    %98 = vmatprep.subr.mxu0 0.0
    %99 = vmatpush1.msra.mxu0 0.0
    %100 = vmatprep.subr.mxu0 0.0
    %101 = vmatpush1.msra.mxu0 0.0
    %102 = vmatprep.subr.mxu0 0.0
    %103 = vmatpush1.msra.mxu0 0.0
    %104 = vmatprep.subr.mxu0 0.0
    %105 = vmatpush1.msra.mxu0 0.0
    %106 = vmatprep.subr.mxu0 0.0
    %107 = vmatpush1.msra.mxu0 0.0
    %108 = vmatprep.subr.mxu0 0.0
    %109 = vmatpush1.msra.mxu0 0.0
    %110 = vmatprep.subr.mxu0 0.0
    %111 = vmatpush1.msra.mxu0 0.0
    %112 = vmatprep.subr.mxu0 0.0
    %113 = vmatpush1.msra.mxu0 0.0
    %114 = vmatprep.subr.mxu0 0.0
    %115 = vmatpush1.msra.mxu0 0.0
    %116 = vmatprep.subr.mxu0 0.0
    %117 = vmatpush1.msra.mxu0 0.0
    %118 = vmatprep.subr.mxu0 0.0
    %119 = vmatpush1.msra.mxu0 0.0
    %120 = vmatprep.subr.mxu0 0.0
    %121 = vmatpush1.msra.mxu0 0.0
    %122 = vmatprep.subr.mxu0 0.0
    %123 = vmatpush1.msra.mxu0 0.0
    %124 = vmatprep.subr.mxu0 0.0
    %125 = vmatpush1.msra.mxu0 0.0
    %126 = vmatprep.subr.mxu0 0.0
    %127 = vmatpush1.msra.mxu0 0.0
    %128 = vmatprep.subr.mxu0 0.0
    %129 = vmatpush1.msra.mxu0 0.0
    %130 = vmatprep.subr.mxu0 0.0
    %131 = vmatpush1.msra.mxu0 0.0
    %132 = vmatprep.subr.mxu0 0.0
    %133 = vmatpush1.msra.mxu0 0.0
    %134 = vmatprep.subr.mxu0 0.0
    %135 = vmatpush1.msra.mxu0 0.0
    %136 = vmatprep.subr.mxu0 0.0
    %137 = vmatpush1.msra.mxu0 0.0
    %138 = vmatprep.subr.mxu0 0.0
    %139 = vmatpush1.msra.mxu0 0.0
    %140 = vmatprep.subr.mxu0 0.0
    %141 = vmatpush1.msra.mxu0 0.0
    %142 = vmatprep.subr.mxu0 0.0
    %143 = vmatpush1.msra.mxu0 0.0
    %144 = vmatprep.subr.mxu0 0.0
    %145 = vmatpush1.msra.mxu0 0.0
    %146 = vmatprep.subr.mxu0 0.0
    %147 = vmatpush1.msra.mxu0 0.0
    %148 = vmatprep.subr.mxu0 0.0
    %149 = vmatpush1.msra.mxu0 0.0
    %150 = vmatprep.subr.mxu0 0.0
    %151 = vmatpush1.msra.mxu0 0.0
    %152 = vmatprep.mubr.f32.mxu0 0.0
    %153 = vmatmul.mubr.f32.gmra.mrb[0].mxu0 %v83
    %v154 = vpop.f32.mrb[0].mxu0
    %v155 = vadd.f32 %v79, %v154
    %v156 = vpop.f32.mrb[0].mxu0
    %157 = vmatprep.mubr.f32.mxu0 0.0
    %158 = vmatmul.mubr.f32.gmra.mrb[0].mxu0 %v86
    %v159 = vpop.f32.mrb[0].mxu0
    %v160 = vadd.f32 %v79, %v159
    %v161 = vpop.f32.mrb[0].mxu0
    %162 = vdwg.mxu0
    %v165 = vcombine.high %v155, %v155
    %v167 = vunpack.c.l.s4 1983009808
    %v168 = vunpack.c.0.s8 %v167
    %v169 = vlaneseq
    %v170 = vshrl.u32 %v169, 7
    %v171 = vsub.s32 %v168, %v170
    %v172 = vrot.slane %v155, %v171
    %v174 = vunpack.c.l.s4 1983009808
    %v175 = vunpack.c.0.s8 %v174
    %v176 = vlaneseq
    %v177 = vshrl.u32 %v176, 7
    %v178 = vsub.s32 %v175, %v177
    %v179 = vrot.slane %v165, %v178
    %v180 = vcombine.high %v172, %v172
    %v181 = vcombine.high %v179, %v179
    %v182 = vcombine.high %v160, %v160
    %v184 = vunpack.c.l.s4 1983009808
    %v185 = vunpack.c.0.s8 %v184
    %v186 = vlaneseq
    %v187 = vshrl.u32 %v186, 7
    %v188 = vsub.s32 %v185, %v187
    %v189 = vrot.slane %v160, %v188
    %v191 = vunpack.c.l.s4 1983009808
    %v192 = vunpack.c.0.s8 %v191
    %v193 = vlaneseq
    %v194 = vshrl.u32 %v193, 7
    %v195 = vsub.s32 %v192, %v194
    %v196 = vrot.slane %v182, %v195
    %v197 = vcombine.high %v189, %v189
    %v198 = vcombine.high %v196, %v196
    %v207 = vld [vmem:[#allocation7] sm:$0xff]
    %v208 = vld [vmem:[#allocation7 + $0x8] sm:$0xff]
    %v209 = vld [vmem:[#allocation7 + $0x10] sm:$0xff]
    %v210 = vld [vmem:[#allocation7 + $0x18] sm:$0xff]
    %v211 = vld [vmem:[#allocation7 + $0x20] sm:$0xff]
    %v212 = vld [vmem:[#allocation7 + $0x28] sm:$0xff]
    %v213 = vld [vmem:[#allocation7 + $0x30] sm:$0xff]
    %v214 = vld [vmem:[#allocation7 + $0x38] sm:$0xff]
    %s215 = scalar_lea.vmem [#allocation7], 64
    %v216 = vld [vmem:[%s215] sm:$0xff]
    %v217 = vld [vmem:[%s215 + $0x8] sm:$0xff]
    %v218 = vld [vmem:[%s215 + $0x10] sm:$0xff]
    %v219 = vld [vmem:[%s215 + $0x18] sm:$0xff]
    %v220 = vld [vmem:[%s215 + $0x20] sm:$0xff]
    %v221 = vld [vmem:[%s215 + $0x28] sm:$0xff]
    %v222 = vld [vmem:[%s215 + $0x30] sm:$0xff]
    %v223 = vld [vmem:[%s215 + $0x38] sm:$0xff]
    %s224 = scalar_lea.vmem %s3, 1
    %v225 = vld [vmem:[%s224] sm:$0x1]
    %v227 = vlaneseq
    %v228 = vshrl.u32 %v227, 7
    %v229 = vsub.s32 0, %v228
    %v230 = vrot.slane %v225, %v229
    %v231 = vld [vmem:[%s4] sm:$0x1]
    %v233 = vlaneseq
    %v234 = vshrl.u32 %v233, 7
    %v235 = vsub.s32 0, %v234
    %v236 = vrot.slane %v231, %v235
    %s237 = scalar_lea.vmem %s4, 1
    %v238 = vld [vmem:[%s237] sm:$0x1]
    %v240 = vlaneseq
    %v241 = vshrl.u32 %v240, 7
    %v242 = vsub.s32 0, %v241
    %v243 = vrot.slane %v238, %v242
    %v244 = vld [vmem:[%s1] sm:$0x3]
    %s245 = scalar_lea.vmem %s1, 2
    %v246 = vld [vmem:[%s245] sm:$0x3]
    %v248 = vsel %vm81, %v244, 0
    %250 = vmatprep.subr.mxu0 %v208
    %251 = vmatpush1.msra.mxu0 %v207
    %252 = vmatprep.subr.mxu0 %v210
    %253 = vmatpush1.msra.mxu0 %v209
    %254 = vmatprep.subr.mxu0 %v212
    %255 = vmatpush1.msra.mxu0 %v211
    %256 = vmatprep.subr.mxu0 %v214
    %257 = vmatpush1.msra.mxu0 %v213
    %258 = vmatprep.subr.mxu0 0.0
    %259 = vmatpush1.msra.mxu0 0.0
    %260 = vmatprep.subr.mxu0 0.0
    %261 = vmatpush1.msra.mxu0 0.0
    %262 = vmatprep.subr.mxu0 0.0
    %263 = vmatpush1.msra.mxu0 0.0
    %264 = vmatprep.subr.mxu0 0.0
    %265 = vmatpush1.msra.mxu0 0.0
    %266 = vmatprep.subr.mxu0 0.0
    %267 = vmatpush1.msra.mxu0 0.0
    %268 = vmatprep.subr.mxu0 0.0
    %269 = vmatpush1.msra.mxu0 0.0
    %270 = vmatprep.subr.mxu0 0.0
    %271 = vmatpush1.msra.mxu0 0.0
    %272 = vmatprep.subr.mxu0 0.0
    %273 = vmatpush1.msra.mxu0 0.0
    %274 = vmatprep.subr.mxu0 0.0
    %275 = vmatpush1.msra.mxu0 0.0
    %276 = vmatprep.subr.mxu0 0.0
    %277 = vmatpush1.msra.mxu0 0.0
    %278 = vmatprep.subr.mxu0 0.0
    %279 = vmatpush1.msra.mxu0 0.0
    %280 = vmatprep.subr.mxu0 0.0
    %281 = vmatpush1.msra.mxu0 0.0
    %282 = vmatprep.subr.mxu0 0.0
    %283 = vmatpush1.msra.mxu0 0.0
    %284 = vmatprep.subr.mxu0 0.0
    %285 = vmatpush1.msra.mxu0 0.0
    %286 = vmatprep.subr.mxu0 0.0
    %287 = vmatpush1.msra.mxu0 0.0
    %288 = vmatprep.subr.mxu0 0.0
    %289 = vmatpush1.msra.mxu0 0.0
    %290 = vmatprep.subr.mxu0 0.0
    %291 = vmatpush1.msra.mxu0 0.0
    %292 = vmatprep.subr.mxu0 0.0
    %293 = vmatpush1.msra.mxu0 0.0
    %294 = vmatprep.subr.mxu0 0.0
    %295 = vmatpush1.msra.mxu0 0.0
    %296 = vmatprep.subr.mxu0 0.0
    %297 = vmatpush1.msra.mxu0 0.0
    %298 = vmatprep.subr.mxu0 0.0
    %299 = vmatpush1.msra.mxu0 0.0
    %300 = vmatprep.subr.mxu0 0.0
    %301 = vmatpush1.msra.mxu0 0.0
    %302 = vmatprep.subr.mxu0 0.0
    %303 = vmatpush1.msra.mxu0 0.0
    %304 = vmatprep.subr.mxu0 0.0
    %305 = vmatpush1.msra.mxu0 0.0
    %306 = vmatprep.subr.mxu0 0.0
    %307 = vmatpush1.msra.mxu0 0.0
    %308 = vmatprep.subr.mxu0 0.0
    %309 = vmatpush1.msra.mxu0 0.0
    %310 = vmatprep.subr.mxu0 0.0
    %311 = vmatpush1.msra.mxu0 0.0
    %312 = vmatprep.subr.mxu0 0.0
    %313 = vmatpush1.msra.mxu0 0.0
    %314 = vmatprep.mubr.f32.mxu0 0.0
    %315 = vmatmul.mubr.f32.gmra.mrb[0].mxu0 %v248
    %v316 = vpop.f32.mrb[0].mxu0
    %v317 = vadd.f32 0.0, %v316
    %v318 = vpop.f32.mrb[0].mxu0
    %319 = vdwg.mxu0
    %v320 = vadd.f32 %v172, %v317
    %v321 = vxor.u32 %v320, 2147483648
    %v322 = vmul.f32 %v321, 1.442695
    %v323 = vpow.pop %v322
    %v324 = vadd.f32 %v323, 1.0
    %v325 = vrcp.pop %v324
    %v326 = vmul.f32 1.0, %v325
    %327 = vrot.lane.b32.xlu0 %v236, 64
    %v328 = vpop.permute.xlu0 %327
    %v330 = vadd.f32 %v317, %v328
    %v333 = vunpack.c.l.s4 1983009808
    %v334 = vunpack.c.0.s8 %v333
    %v335 = vlaneseq
    %v336 = vshrl.u32 %v335, 7
    %v337 = vsub.s32 %v334, %v336
    %v338 = vrot.slane %v330, %v337
    %339 = vrot.lane.b32.xlu0 %v338, 64
    %v340 = vpop.permute.xlu0 %339
    %v342 = vmul.f32 %v326, %v340
    %344 = vrot.lane.b32.xlu0 %v342, 64
    %v345 = vpop.permute.xlu0 %344
    %v347 = vadd.f32 %v172, %v345
    %v348 = vtanh.pop %v347
    %v349 = vsub.f32 1.0, %v326
    %351 = vrot.lane.b32.xlu0 %v348, 96
    %v352 = vpop.permute.xlu0 %351
    %v354 = vmul.f32 %v349, %v352
    %v356 = vunpack.c.l.s4 1983009808
    %v357 = vunpack.c.0.s8 %v356
    %v358 = vlaneseq
    %v359 = vshrl.u32 %v358, 7
    %v360 = vsub.s32 %v357, %v359
    %v361 = vrot.slane %v244, %v360
    %362 = vrot.lane.b32.xlu0 %v361, 32
    %v363 = vpop.permute.xlu0 %362
    %v365 = vmul.f32 %v326, %v363
    %v366 = vadd.f32 %v354, %v365
    %v369 = vunpack.c.l.s4 1983009808
    %v370 = vunpack.c.0.s8 %v369
    %v371 = vlaneseq
    %v372 = vshrl.u32 %v371, 7
    %v373 = vsub.s32 %v370, %v372
    %v374 = vrot.slane %v366, %v373
    %375 = vrot.lane.b32.xlu0 %v374, 96
    %v376 = vpop.permute.xlu0 %375
    %v377 = vsel %vm81, %v376, 0
    %379 = vmatprep.subr.mxu0 %v208
    %380 = vmatpush1.msra.mxu0 %v207
    %381 = vmatprep.subr.mxu0 %v210
    %382 = vmatpush1.msra.mxu0 %v209
    %383 = vmatprep.subr.mxu0 %v212
    %384 = vmatpush1.msra.mxu0 %v211
    %385 = vmatprep.subr.mxu0 %v214
    %386 = vmatpush1.msra.mxu0 %v213
    %387 = vmatprep.subr.mxu0 0.0
    %388 = vmatpush1.msra.mxu0 0.0
    %389 = vmatprep.subr.mxu0 0.0
    %390 = vmatpush1.msra.mxu0 0.0
    %391 = vmatprep.subr.mxu0 0.0
    %392 = vmatpush1.msra.mxu0 0.0
    %393 = vmatprep.subr.mxu0 0.0
    %394 = vmatpush1.msra.mxu0 0.0
    %395 = vmatprep.subr.mxu0 0.0
    %396 = vmatpush1.msra.mxu0 0.0
    %397 = vmatprep.subr.mxu0 0.0
    %398 = vmatpush1.msra.mxu0 0.0
    %399 = vmatprep.subr.mxu0 0.0
    %400 = vmatpush1.msra.mxu0 0.0
    %401 = vmatprep.subr.mxu0 0.0
    %402 = vmatpush1.msra.mxu0 0.0
    %403 = vmatprep.subr.mxu0 0.0
    %404 = vmatpush1.msra.mxu0 0.0
    %405 = vmatprep.subr.mxu0 0.0
    %406 = vmatpush1.msra.mxu0 0.0
    %407 = vmatprep.subr.mxu0 0.0
    %408 = vmatpush1.msra.mxu0 0.0
    %409 = vmatprep.subr.mxu0 0.0
    %410 = vmatpush1.msra.mxu0 0.0
    %411 = vmatprep.subr.mxu0 0.0
    %412 = vmatpush1.msra.mxu0 0.0
    %413 = vmatprep.subr.mxu0 0.0
    %414 = vmatpush1.msra.mxu0 0.0
    %415 = vmatprep.subr.mxu0 0.0
    %416 = vmatpush1.msra.mxu0 0.0
    %417 = vmatprep.subr.mxu0 0.0
    %418 = vmatpush1.msra.mxu0 0.0
    %419 = vmatprep.subr.mxu0 0.0
    %420 = vmatpush1.msra.mxu0 0.0
    %421 = vmatprep.subr.mxu0 0.0
    %422 = vmatpush1.msra.mxu0 0.0
    %423 = vmatprep.subr.mxu0 0.0
    %424 = vmatpush1.msra.mxu0 0.0
    %425 = vmatprep.subr.mxu0 0.0
    %426 = vmatpush1.msra.mxu0 0.0
    %427 = vmatprep.subr.mxu0 0.0
    %428 = vmatpush1.msra.mxu0 0.0
    %429 = vmatprep.subr.mxu0 0.0
    %430 = vmatpush1.msra.mxu0 0.0
    %431 = vmatprep.subr.mxu0 0.0
    %432 = vmatpush1.msra.mxu0 0.0
    %433 = vmatprep.subr.mxu0 0.0
    %434 = vmatpush1.msra.mxu0 0.0
    %435 = vmatprep.subr.mxu0 0.0
    %436 = vmatpush1.msra.mxu0 0.0
    %437 = vmatprep.subr.mxu0 0.0
    %438 = vmatpush1.msra.mxu0 0.0
    %439 = vmatprep.subr.mxu0 0.0
    %440 = vmatpush1.msra.mxu0 0.0
    %441 = vmatprep.subr.mxu0 0.0
    %442 = vmatpush1.msra.mxu0 0.0
    %443 = vmatprep.mubr.f32.mxu0 0.0
    %444 = vmatmul.mubr.f32.gmra.mrb[0].mxu0 %v377
    %v445 = vpop.f32.mrb[0].mxu0
    %v446 = vadd.f32 0.0, %v445
    %v447 = vpop.f32.mrb[0].mxu0
    %v448 = vadd.f32 0.0, %v447
    %449 = vdwg.mxu0
    %v451 = vsel %vm81, %v246, 0
    %453 = vmatprep.subr.mxu0 %v217
    %454 = vmatpush1.msra.mxu0 %v216
    %455 = vmatprep.subr.mxu0 %v219
    %456 = vmatpush1.msra.mxu0 %v218
    %457 = vmatprep.subr.mxu0 %v221
    %458 = vmatpush1.msra.mxu0 %v220
    %459 = vmatprep.subr.mxu0 %v223
    %460 = vmatpush1.msra.mxu0 %v222
    %461 = vmatprep.subr.mxu0 0.0
    %462 = vmatpush1.msra.mxu0 0.0
    %463 = vmatprep.subr.mxu0 0.0
    %464 = vmatpush1.msra.mxu0 0.0
    %465 = vmatprep.subr.mxu0 0.0
    %466 = vmatpush1.msra.mxu0 0.0
    %467 = vmatprep.subr.mxu0 0.0
    %468 = vmatpush1.msra.mxu0 0.0
    %469 = vmatprep.subr.mxu0 0.0
    %470 = vmatpush1.msra.mxu0 0.0
    %471 = vmatprep.subr.mxu0 0.0
    %472 = vmatpush1.msra.mxu0 0.0
    %473 = vmatprep.subr.mxu0 0.0
    %474 = vmatpush1.msra.mxu0 0.0
    %475 = vmatprep.subr.mxu0 0.0
    %476 = vmatpush1.msra.mxu0 0.0
    %477 = vmatprep.subr.mxu0 0.0
    %478 = vmatpush1.msra.mxu0 0.0
    %479 = vmatprep.subr.mxu0 0.0
    %480 = vmatpush1.msra.mxu0 0.0
    %481 = vmatprep.subr.mxu0 0.0
    %482 = vmatpush1.msra.mxu0 0.0
    %483 = vmatprep.subr.mxu0 0.0
    %484 = vmatpush1.msra.mxu0 0.0
    %485 = vmatprep.subr.mxu0 0.0
    %486 = vmatpush1.msra.mxu0 0.0
    %487 = vmatprep.subr.mxu0 0.0
    %488 = vmatpush1.msra.mxu0 0.0
    %489 = vmatprep.subr.mxu0 0.0
    %490 = vmatpush1.msra.mxu0 0.0
    %491 = vmatprep.subr.mxu0 0.0
    %492 = vmatpush1.msra.mxu0 0.0
    %493 = vmatprep.subr.mxu0 0.0
    %494 = vmatpush1.msra.mxu0 0.0
    %495 = vmatprep.subr.mxu0 0.0
    %496 = vmatpush1.msra.mxu0 0.0
    %497 = vmatprep.subr.mxu0 0.0
    %498 = vmatpush1.msra.mxu0 0.0
    %499 = vmatprep.subr.mxu0 0.0
    %500 = vmatpush1.msra.mxu0 0.0
    %501 = vmatprep.subr.mxu0 0.0
    %502 = vmatpush1.msra.mxu0 0.0
    %503 = vmatprep.subr.mxu0 0.0
    %504 = vmatpush1.msra.mxu0 0.0
    %505 = vmatprep.subr.mxu0 0.0
    %506 = vmatpush1.msra.mxu0 0.0
    %507 = vmatprep.subr.mxu0 0.0
    %508 = vmatpush1.msra.mxu0 0.0
    %509 = vmatprep.subr.mxu0 0.0
    %510 = vmatpush1.msra.mxu0 0.0
    %511 = vmatprep.subr.mxu0 0.0
    %512 = vmatpush1.msra.mxu0 0.0
    %513 = vmatprep.subr.mxu0 0.0
    %514 = vmatpush1.msra.mxu0 0.0
    %515 = vmatprep.subr.mxu0 0.0
    %516 = vmatpush1.msra.mxu0 0.0
    %517 = vmatprep.mubr.f32.mxu0 0.0
    %518 = vmatmul.mubr.f32.gmra.mrb[0].mxu0 %v451
    %v519 = vpop.f32.mrb[0].mxu0
    %v520 = vadd.f32 0.0, %v519
    %v521 = vpop.f32.mrb[0].mxu0
    %522 = vdwg.mxu0
    %v523 = vadd.f32 %v180, %v446
    %v524 = vxor.u32 %v523, 2147483648
    %v525 = vmul.f32 %v524, 1.442695
    %v526 = vpow.pop %v525
    %v527 = vadd.f32 %v526, 1.0
    %v528 = vrcp.pop %v527
    %v529 = vmul.f32 1.0, %v528
    %v530 = vadd.f32 %v446, %v328
    %v533 = vunpack.c.l.s4 1983009808
    %v534 = vunpack.c.0.s8 %v533
    %v535 = vlaneseq
    %v536 = vshrl.u32 %v535, 7
    %v537 = vsub.s32 %v534, %v536
    %v538 = vrot.slane %v530, %v537
    %539 = vrot.lane.b32.xlu0 %v538, 64
    %v540 = vpop.permute.xlu0 %539
    %v542 = vmul.f32 %v529, %v540
    %544 = vrot.lane.b32.xlu0 %v542, 64
    %v545 = vpop.permute.xlu0 %544
    %v547 = vadd.f32 %v180, %v545
    %v548 = vtanh.pop %v547
    %v549 = vsub.f32 1.0, %v529
    %551 = vrot.lane.b32.xlu0 %v548, 96
    %v552 = vpop.permute.xlu0 %551
    %v554 = vmul.f32 %v549, %v552
    %v555 = vmul.f32 %v529, %v366
    %v556 = vadd.f32 %v554, %v555
    %557 = vrot.lane.b32.xlu0 %v230, 96
    %v558 = vpop.permute.xlu0 %557
    %v560 = vadd.f32 %v446, %v558
    %v561 = vadd.f32 %v448, %v558
    %563 = vrot.lane.b32.xlu0 %v520, 96
    %v564 = vpop.permute.xlu0 %563
    %v566 = vadd.f32 %v560, %v564
    %v567 = vxor.u32 %v566, 2147483648
    %v568 = vmul.f32 %v567, 1.442695
    %v569 = vpow.pop %v568
    %v570 = vadd.f32 %v569, 1.0
    %v571 = vrcp.pop %v570
    %v572 = vmul.f32 1.0, %v571
    %v573 = vadd.f32 %v561, %v564
    %v574 = vxor.u32 %v573, 2147483648
    %v575 = vmul.f32 %v574, 1.442695
    %v576 = vpow.pop %v575
    %v577 = vadd.f32 %v576, 1.0
    %v578 = vrcp.pop %v577
    %v579 = vmul.f32 1.0, %v578
    %580 = vrot.lane.b32.xlu0 %v243, 64
    %v581 = vpop.permute.xlu0 %580
    %v583 = vadd.f32 %v520, %v581
    %585 = vrot.lane.b32.xlu0 %v583, 32
    %v586 = vpop.permute.xlu0 %585
    %v588 = vmul.f32 %v572, %v586
    %590 = vrot.lane.b32.xlu0 %v588, 64
    %v591 = vpop.permute.xlu0 %590
    %v593 = vadd.f32 %v561, %v591
    %v594 = vtanh.pop %v593
    %v595 = vsub.f32 1.0, %v579
    %597 = vrot.lane.b32.xlu0 %v594, 96
    %v598 = vpop.permute.xlu0 %597
    %v600 = vmul.f32 %v595, %v598
    %v601 = vmul.f32 %v579, %v246
    %v602 = vadd.f32 %v600, %v601
    %v605 = vunpack.c.l.s4 1983009808
    %v606 = vunpack.c.0.s8 %v605
    %v607 = vlaneseq
    %v608 = vshrl.u32 %v607, 7
    %v609 = vsub.s32 %v606, %v608
    %v610 = vrot.slane %v556, %v609
    %611 = vrot.lane.b32.xlu0 %v610, 96
    %v612 = vpop.permute.xlu0 %611
    %v613 = vsel %vm81, %v612, 0
    %615 = vmatprep.subr.mxu0 %v208
    %616 = vmatpush1.msra.mxu0 %v207
    %617 = vmatprep.subr.mxu0 %v210
    %618 = vmatpush1.msra.mxu0 %v209
    %619 = vmatprep.subr.mxu0 %v212
    %620 = vmatpush1.msra.mxu0 %v211
    %621 = vmatprep.subr.mxu0 %v214
    %622 = vmatpush1.msra.mxu0 %v213
    %623 = vmatprep.subr.mxu0 0.0
    %624 = vmatpush1.msra.mxu0 0.0
    %625 = vmatprep.subr.mxu0 0.0
    %626 = vmatpush1.msra.mxu0 0.0
    %627 = vmatprep.subr.mxu0 0.0
    %628 = vmatpush1.msra.mxu0 0.0
    %629 = vmatprep.subr.mxu0 0.0
    %630 = vmatpush1.msra.mxu0 0.0
    %631 = vmatprep.subr.mxu0 0.0
    %632 = vmatpush1.msra.mxu0 0.0
    %633 = vmatprep.subr.mxu0 0.0
    %634 = vmatpush1.msra.mxu0 0.0
    %635 = vmatprep.subr.mxu0 0.0
    %636 = vmatpush1.msra.mxu0 0.0
    %637 = vmatprep.subr.mxu0 0.0
    %638 = vmatpush1.msra.mxu0 0.0
    %639 = vmatprep.subr.mxu0 0.0
    %640 = vmatpush1.msra.mxu0 0.0
    %641 = vmatprep.subr.mxu0 0.0
    %642 = vmatpush1.msra.mxu0 0.0
    %643 = vmatprep.subr.mxu0 0.0
    %644 = vmatpush1.msra.mxu0 0.0
    %645 = vmatprep.subr.mxu0 0.0
    %646 = vmatpush1.msra.mxu0 0.0
    %647 = vmatprep.subr.mxu0 0.0
    %648 = vmatpush1.msra.mxu0 0.0
    %649 = vmatprep.subr.mxu0 0.0
    %650 = vmatpush1.msra.mxu0 0.0
    %651 = vmatprep.subr.mxu0 0.0
    %652 = vmatpush1.msra.mxu0 0.0
    %653 = vmatprep.subr.mxu0 0.0
    %654 = vmatpush1.msra.mxu0 0.0
    %655 = vmatprep.subr.mxu0 0.0
    %656 = vmatpush1.msra.mxu0 0.0
    %657 = vmatprep.subr.mxu0 0.0
    %658 = vmatpush1.msra.mxu0 0.0
    %659 = vmatprep.subr.mxu0 0.0
    %660 = vmatpush1.msra.mxu0 0.0
    %661 = vmatprep.subr.mxu0 0.0
    %662 = vmatpush1.msra.mxu0 0.0
    %663 = vmatprep.subr.mxu0 0.0
    %664 = vmatpush1.msra.mxu0 0.0
    %665 = vmatprep.subr.mxu0 0.0
    %666 = vmatpush1.msra.mxu0 0.0
    %667 = vmatprep.subr.mxu0 0.0
    %668 = vmatpush1.msra.mxu0 0.0
    %669 = vmatprep.subr.mxu0 0.0
    %670 = vmatpush1.msra.mxu0 0.0
    %671 = vmatprep.subr.mxu0 0.0
    %672 = vmatpush1.msra.mxu0 0.0
    %673 = vmatprep.subr.mxu0 0.0
    %674 = vmatpush1.msra.mxu0 0.0
    %675 = vmatprep.subr.mxu0 0.0
    %676 = vmatpush1.msra.mxu0 0.0
    %677 = vmatprep.subr.mxu0 0.0
    %678 = vmatpush1.msra.mxu0 0.0
    %679 = vmatprep.mubr.f32.mxu0 0.0
    %680 = vmatmul.mubr.f32.gmra.mrb[0].mxu0 %v613
    %v681 = vpop.f32.mrb[0].mxu0
    %v682 = vadd.f32 0.0, %v681
    %v683 = vpop.f32.mrb[0].mxu0
    %v684 = vadd.f32 0.0, %v683
    %685 = vdwg.mxu0
    %v687 = vsel %vm81, %v602, 0
    %689 = vmatprep.subr.mxu0 %v217
    %690 = vmatpush1.msra.mxu0 %v216
    %691 = vmatprep.subr.mxu0 %v219
    %692 = vmatpush1.msra.mxu0 %v218
    %693 = vmatprep.subr.mxu0 %v221
    %694 = vmatpush1.msra.mxu0 %v220
    %695 = vmatprep.subr.mxu0 %v223
    %696 = vmatpush1.msra.mxu0 %v222
    %697 = vmatprep.subr.mxu0 0.0
    %698 = vmatpush1.msra.mxu0 0.0
    %699 = vmatprep.subr.mxu0 0.0
    %700 = vmatpush1.msra.mxu0 0.0
    %701 = vmatprep.subr.mxu0 0.0
    %702 = vmatpush1.msra.mxu0 0.0
    %703 = vmatprep.subr.mxu0 0.0
    %704 = vmatpush1.msra.mxu0 0.0
    %705 = vmatprep.subr.mxu0 0.0
    %706 = vmatpush1.msra.mxu0 0.0
    %707 = vmatprep.subr.mxu0 0.0
    %708 = vmatpush1.msra.mxu0 0.0
    %709 = vmatprep.subr.mxu0 0.0
    %710 = vmatpush1.msra.mxu0 0.0
    %711 = vmatprep.subr.mxu0 0.0
    %712 = vmatpush1.msra.mxu0 0.0
    %713 = vmatprep.subr.mxu0 0.0
    %714 = vmatpush1.msra.mxu0 0.0
    %715 = vmatprep.subr.mxu0 0.0
    %716 = vmatpush1.msra.mxu0 0.0
    %717 = vmatprep.subr.mxu0 0.0
    %718 = vmatpush1.msra.mxu0 0.0
    %719 = vmatprep.subr.mxu0 0.0
    %720 = vmatpush1.msra.mxu0 0.0
    %721 = vmatprep.subr.mxu0 0.0
    %722 = vmatpush1.msra.mxu0 0.0
    %723 = vmatprep.subr.mxu0 0.0
    %724 = vmatpush1.msra.mxu0 0.0
    %725 = vmatprep.subr.mxu0 0.0
    %726 = vmatpush1.msra.mxu0 0.0
    %727 = vmatprep.subr.mxu0 0.0
    %728 = vmatpush1.msra.mxu0 0.0
    %729 = vmatprep.subr.mxu0 0.0
    %730 = vmatpush1.msra.mxu0 0.0
    %731 = vmatprep.subr.mxu0 0.0
    %732 = vmatpush1.msra.mxu0 0.0
    %733 = vmatprep.subr.mxu0 0.0
    %734 = vmatpush1.msra.mxu0 0.0
    %735 = vmatprep.subr.mxu0 0.0
    %736 = vmatpush1.msra.mxu0 0.0
    %737 = vmatprep.subr.mxu0 0.0
    %738 = vmatpush1.msra.mxu0 0.0
    %739 = vmatprep.subr.mxu0 0.0
    %740 = vmatpush1.msra.mxu0 0.0
    %741 = vmatprep.subr.mxu0 0.0
    %742 = vmatpush1.msra.mxu0 0.0
    %743 = vmatprep.subr.mxu0 0.0
    %744 = vmatpush1.msra.mxu0 0.0
    %745 = vmatprep.subr.mxu0 0.0
    %746 = vmatpush1.msra.mxu0 0.0
    %747 = vmatprep.subr.mxu0 0.0
    %748 = vmatpush1.msra.mxu0 0.0
    %749 = vmatprep.subr.mxu0 0.0
    %750 = vmatpush1.msra.mxu0 0.0
    %751 = vmatprep.subr.mxu0 0.0
    %752 = vmatpush1.msra.mxu0 0.0
    %753 = vmatprep.mubr.f32.mxu0 0.0
    %754 = vmatmul.mubr.f32.gmra.mrb[0].mxu0 %v687
    %v755 = vpop.f32.mrb[0].mxu0
    %v756 = vadd.f32 0.0, %v755
    %v757 = vpop.f32.mrb[0].mxu0
    %758 = vdwg.mxu0
    %v759 = vadd.f32 %v179, %v682
    %v760 = vxor.u32 %v759, 2147483648
    %v761 = vmul.f32 %v760, 1.442695
    %v762 = vpow.pop %v761
    %v763 = vadd.f32 %v762, 1.0
    %v764 = vrcp.pop %v763
    %v765 = vmul.f32 1.0, %v764
    %v766 = vadd.f32 %v682, %v328
    %v769 = vunpack.c.l.s4 1983009808
    %v770 = vunpack.c.0.s8 %v769
    %v771 = vlaneseq
    %v772 = vshrl.u32 %v771, 7
    %v773 = vsub.s32 %v770, %v772
    %v774 = vrot.slane %v766, %v773
    %775 = vrot.lane.b32.xlu0 %v774, 64
    %v776 = vpop.permute.xlu0 %775
    %v778 = vmul.f32 %v765, %v776
    %780 = vrot.lane.b32.xlu0 %v778, 64
    %v781 = vpop.permute.xlu0 %780
    %v783 = vadd.f32 %v179, %v781
    %v784 = vtanh.pop %v783
    %v785 = vsub.f32 1.0, %v765
    %787 = vrot.lane.b32.xlu0 %v784, 96
    %v788 = vpop.permute.xlu0 %787
    %v790 = vmul.f32 %v785, %v788
    %v791 = vmul.f32 %v765, %v556
    %v792 = vadd.f32 %v790, %v791
    %v793 = vadd.f32 %v682, %v558
    %v794 = vadd.f32 %v684, %v558
    %796 = vrot.lane.b32.xlu0 %v756, 96
    %v797 = vpop.permute.xlu0 %796
    %v799 = vadd.f32 %v793, %v797
    %v800 = vxor.u32 %v799, 2147483648
    %v801 = vmul.f32 %v800, 1.442695
    %v802 = vpow.pop %v801
    %v803 = vadd.f32 %v802, 1.0
    %v804 = vrcp.pop %v803
    %v805 = vmul.f32 1.0, %v804
    %v806 = vadd.f32 %v794, %v797
    %v807 = vxor.u32 %v806, 2147483648
    %v808 = vmul.f32 %v807, 1.442695
    %v809 = vpow.pop %v808
    %v810 = vadd.f32 %v809, 1.0
    %v811 = vrcp.pop %v810
    %v812 = vmul.f32 1.0, %v811
    %v813 = vadd.f32 %v756, %v581
    %815 = vrot.lane.b32.xlu0 %v813, 32
    %v816 = vpop.permute.xlu0 %815
    %v818 = vmul.f32 %v805, %v816
    %820 = vrot.lane.b32.xlu0 %v818, 64
    %v821 = vpop.permute.xlu0 %820
    %v823 = vadd.f32 %v794, %v821
    %v824 = vtanh.pop %v823
    %v825 = vsub.f32 1.0, %v812
    %827 = vrot.lane.b32.xlu0 %v824, 96
    %v828 = vpop.permute.xlu0 %827
    %v830 = vmul.f32 %v825, %v828
    %v831 = vmul.f32 %v812, %v602
    %v832 = vadd.f32 %v830, %v831
    %v835 = vunpack.c.l.s4 1983009808
    %v836 = vunpack.c.0.s8 %v835
    %v837 = vlaneseq
    %v838 = vshrl.u32 %v837, 7
    %v839 = vsub.s32 %v836, %v838
    %v840 = vrot.slane %v792, %v839
    %841 = vrot.lane.b32.xlu0 %v840, 96
    %v842 = vpop.permute.xlu0 %841
    %v843 = vsel %vm81, %v842, 0
    %845 = vmatprep.subr.mxu0 %v208
    %846 = vmatpush1.msra.mxu0 %v207
    %847 = vmatprep.subr.mxu0 %v210
    %848 = vmatpush1.msra.mxu0 %v209
    %849 = vmatprep.subr.mxu0 %v212
    %850 = vmatpush1.msra.mxu0 %v211
    %851 = vmatprep.subr.mxu0 %v214
    %852 = vmatpush1.msra.mxu0 %v213
    %853 = vmatprep.subr.mxu0 0.0
    %854 = vmatpush1.msra.mxu0 0.0
    %855 = vmatprep.subr.mxu0 0.0
    %856 = vmatpush1.msra.mxu0 0.0
    %857 = vmatprep.subr.mxu0 0.0
    %858 = vmatpush1.msra.mxu0 0.0
    %859 = vmatprep.subr.mxu0 0.0
    %860 = vmatpush1.msra.mxu0 0.0
    %861 = vmatprep.subr.mxu0 0.0
    %862 = vmatpush1.msra.mxu0 0.0
    %863 = vmatprep.subr.mxu0 0.0
    %864 = vmatpush1.msra.mxu0 0.0
    %865 = vmatprep.subr.mxu0 0.0
    %866 = vmatpush1.msra.mxu0 0.0
    %867 = vmatprep.subr.mxu0 0.0
    %868 = vmatpush1.msra.mxu0 0.0
    %869 = vmatprep.subr.mxu0 0.0
    %870 = vmatpush1.msra.mxu0 0.0
    %871 = vmatprep.subr.mxu0 0.0
    %872 = vmatpush1.msra.mxu0 0.0
    %873 = vmatprep.subr.mxu0 0.0
    %874 = vmatpush1.msra.mxu0 0.0
    %875 = vmatprep.subr.mxu0 0.0
    %876 = vmatpush1.msra.mxu0 0.0
    %877 = vmatprep.subr.mxu0 0.0
    %878 = vmatpush1.msra.mxu0 0.0
    %879 = vmatprep.subr.mxu0 0.0
    %880 = vmatpush1.msra.mxu0 0.0
    %881 = vmatprep.subr.mxu0 0.0
    %882 = vmatpush1.msra.mxu0 0.0
    %883 = vmatprep.subr.mxu0 0.0
    %884 = vmatpush1.msra.mxu0 0.0
    %885 = vmatprep.subr.mxu0 0.0
    %886 = vmatpush1.msra.mxu0 0.0
    %887 = vmatprep.subr.mxu0 0.0
    %888 = vmatpush1.msra.mxu0 0.0
    %889 = vmatprep.subr.mxu0 0.0
    %890 = vmatpush1.msra.mxu0 0.0
    %891 = vmatprep.subr.mxu0 0.0
    %892 = vmatpush1.msra.mxu0 0.0
    %893 = vmatprep.subr.mxu0 0.0
    %894 = vmatpush1.msra.mxu0 0.0
    %895 = vmatprep.subr.mxu0 0.0
    %896 = vmatpush1.msra.mxu0 0.0
    %897 = vmatprep.subr.mxu0 0.0
    %898 = vmatpush1.msra.mxu0 0.0
    %899 = vmatprep.subr.mxu0 0.0
    %900 = vmatpush1.msra.mxu0 0.0
    %901 = vmatprep.subr.mxu0 0.0
    %902 = vmatpush1.msra.mxu0 0.0
    %903 = vmatprep.subr.mxu0 0.0
    %904 = vmatpush1.msra.mxu0 0.0
    %905 = vmatprep.subr.mxu0 0.0
    %906 = vmatpush1.msra.mxu0 0.0
    %907 = vmatprep.subr.mxu0 0.0
    %908 = vmatpush1.msra.mxu0 0.0
    %909 = vmatprep.mubr.f32.mxu0 0.0
    %910 = vmatmul.mubr.f32.gmra.mrb[0].mxu0 %v843
    %v911 = vpop.f32.mrb[0].mxu0
    %v912 = vadd.f32 0.0, %v911
    %v913 = vpop.f32.mrb[0].mxu0
    %v914 = vadd.f32 0.0, %v913
    %915 = vdwg.mxu0
    %v917 = vsel %vm81, %v832, 0
    %919 = vmatprep.subr.mxu0 %v217
    %920 = vmatpush1.msra.mxu0 %v216
    %921 = vmatprep.subr.mxu0 %v219
    %922 = vmatpush1.msra.mxu0 %v218
    %923 = vmatprep.subr.mxu0 %v221
    %924 = vmatpush1.msra.mxu0 %v220
    %925 = vmatprep.subr.mxu0 %v223
    %926 = vmatpush1.msra.mxu0 %v222
    %927 = vmatprep.subr.mxu0 0.0
    %928 = vmatpush1.msra.mxu0 0.0
    %929 = vmatprep.subr.mxu0 0.0
    %930 = vmatpush1.msra.mxu0 0.0
    %931 = vmatprep.subr.mxu0 0.0
    %932 = vmatpush1.msra.mxu0 0.0
    %933 = vmatprep.subr.mxu0 0.0
    %934 = vmatpush1.msra.mxu0 0.0
    %935 = vmatprep.subr.mxu0 0.0
    %936 = vmatpush1.msra.mxu0 0.0
    %937 = vmatprep.subr.mxu0 0.0
    %938 = vmatpush1.msra.mxu0 0.0
    %939 = vmatprep.subr.mxu0 0.0
    %940 = vmatpush1.msra.mxu0 0.0
    %941 = vmatprep.subr.mxu0 0.0
    %942 = vmatpush1.msra.mxu0 0.0
    %943 = vmatprep.subr.mxu0 0.0
    %944 = vmatpush1.msra.mxu0 0.0
    %945 = vmatprep.subr.mxu0 0.0
    %946 = vmatpush1.msra.mxu0 0.0
    %947 = vmatprep.subr.mxu0 0.0
    %948 = vmatpush1.msra.mxu0 0.0
    %949 = vmatprep.subr.mxu0 0.0
    %950 = vmatpush1.msra.mxu0 0.0
    %951 = vmatprep.subr.mxu0 0.0
    %952 = vmatpush1.msra.mxu0 0.0
    %953 = vmatprep.subr.mxu0 0.0
    %954 = vmatpush1.msra.mxu0 0.0
    %955 = vmatprep.subr.mxu0 0.0
    %956 = vmatpush1.msra.mxu0 0.0
    %957 = vmatprep.subr.mxu0 0.0
    %958 = vmatpush1.msra.mxu0 0.0
    %959 = vmatprep.subr.mxu0 0.0
    %960 = vmatpush1.msra.mxu0 0.0
    %961 = vmatprep.subr.mxu0 0.0
    %962 = vmatpush1.msra.mxu0 0.0
    %963 = vmatprep.subr.mxu0 0.0
    %964 = vmatpush1.msra.mxu0 0.0
    %965 = vmatprep.subr.mxu0 0.0
    %966 = vmatpush1.msra.mxu0 0.0
    %967 = vmatprep.subr.mxu0 0.0
    %968 = vmatpush1.msra.mxu0 0.0
    %969 = vmatprep.subr.mxu0 0.0
    %970 = vmatpush1.msra.mxu0 0.0
    %971 = vmatprep.subr.mxu0 0.0
    %972 = vmatpush1.msra.mxu0 0.0
    %973 = vmatprep.subr.mxu0 0.0
    %974 = vmatpush1.msra.mxu0 0.0
    %975 = vmatprep.subr.mxu0 0.0
    %976 = vmatpush1.msra.mxu0 0.0
    %977 = vmatprep.subr.mxu0 0.0
    %978 = vmatpush1.msra.mxu0 0.0
    %979 = vmatprep.subr.mxu0 0.0
    %980 = vmatpush1.msra.mxu0 0.0
    %981 = vmatprep.subr.mxu0 0.0
    %982 = vmatpush1.msra.mxu0 0.0
    %983 = vmatprep.mubr.f32.mxu0 0.0
    %984 = vmatmul.mubr.f32.gmra.mrb[0].mxu0 %v917
    %v985 = vpop.f32.mrb[0].mxu0
    %v986 = vadd.f32 0.0, %v985
    %v987 = vpop.f32.mrb[0].mxu0
    %988 = vdwg.mxu0
    %v989 = vadd.f32 %v181, %v912
    %v990 = vxor.u32 %v989, 2147483648
    %v991 = vmul.f32 %v990, 1.442695
    %v992 = vpow.pop %v991
    %v993 = vadd.f32 %v992, 1.0
    %v994 = vrcp.pop %v993
    %v995 = vmul.f32 1.0, %v994
    %v996 = vadd.f32 %v912, %v328
    %v999 = vunpack.c.l.s4 1983009808
    %v1000 = vunpack.c.0.s8 %v999
    %v1001 = vlaneseq
    %v1002 = vshrl.u32 %v1001, 7
    %v1003 = vsub.s32 %v1000, %v1002
    %v1004 = vrot.slane %v996, %v1003
    %1005 = vrot.lane.b32.xlu0 %v1004, 64
    %v1006 = vpop.permute.xlu0 %1005
    %v1008 = vmul.f32 %v995, %v1006
    %1010 = vrot.lane.b32.xlu0 %v1008, 64
    %v1011 = vpop.permute.xlu0 %1010
    %v1013 = vadd.f32 %v181, %v1011
    %v1014 = vtanh.pop %v1013
    %v1015 = vsub.f32 1.0, %v995
    %1017 = vrot.lane.b32.xlu0 %v1014, 96
    %v1018 = vpop.permute.xlu0 %1017
    %v1020 = vmul.f32 %v1015, %v1018
    %v1021 = vmul.f32 %v995, %v792
    %v1022 = vadd.f32 %v1020, %v1021
    %v1023 = vadd.f32 %v912, %v558
    %v1024 = vadd.f32 %v914, %v558
    %1026 = vrot.lane.b32.xlu0 %v986, 96
    %v1027 = vpop.permute.xlu0 %1026
    %v1029 = vadd.f32 %v1023, %v1027
    %v1030 = vxor.u32 %v1029, 2147483648
    %v1031 = vmul.f32 %v1030, 1.442695
    %v1032 = vpow.pop %v1031
    %v1033 = vadd.f32 %v1032, 1.0
    %v1034 = vrcp.pop %v1033
    %v1035 = vmul.f32 1.0, %v1034
    %v1036 = vadd.f32 %v1024, %v1027
    %v1037 = vxor.u32 %v1036, 2147483648
    %v1038 = vmul.f32 %v1037, 1.442695
    %v1039 = vpow.pop %v1038
    %v1040 = vadd.f32 %v1039, 1.0
    %v1041 = vrcp.pop %v1040
    %v1042 = vmul.f32 1.0, %v1041
    %v1043 = vadd.f32 %v986, %v581
    %1045 = vrot.lane.b32.xlu0 %v1043, 32
    %v1046 = vpop.permute.xlu0 %1045
    %v1048 = vmul.f32 %v1035, %v1046
    %1050 = vrot.lane.b32.xlu0 %v1048, 64
    %v1051 = vpop.permute.xlu0 %1050
    %v1053 = vadd.f32 %v1024, %v1051
    %v1054 = vtanh.pop %v1053
    %v1055 = vsub.f32 1.0, %v1042
    %1057 = vrot.lane.b32.xlu0 %v1054, 96
    %v1058 = vpop.permute.xlu0 %1057
    %v1060 = vmul.f32 %v1055, %v1058
    %v1061 = vmul.f32 %v1042, %v832
    %v1062 = vadd.f32 %v1060, %v1061
    %v1065 = vunpack.c.l.s4 1983009808
    %v1066 = vunpack.c.0.s8 %v1065
    %v1067 = vlaneseq
    %v1068 = vshrl.u32 %v1067, 7
    %v1069 = vsub.s32 %v1066, %v1068
    %v1070 = vrot.slane %v1022, %v1069
    %1071 = vrot.lane.b32.xlu0 %v1070, 96
    %v1072 = vpop.permute.xlu0 %1071
    %v1073 = vsel %vm81, %v1072, 0
    %1075 = vmatprep.subr.mxu0 %v208
    %1076 = vmatpush1.msra.mxu0 %v207
    %1077 = vmatprep.subr.mxu0 %v210
    %1078 = vmatpush1.msra.mxu0 %v209
    %1079 = vmatprep.subr.mxu0 %v212
    %1080 = vmatpush1.msra.mxu0 %v211
    %1081 = vmatprep.subr.mxu0 %v214
    %1082 = vmatpush1.msra.mxu0 %v213
    %1083 = vmatprep.subr.mxu0 0.0
    %1084 = vmatpush1.msra.mxu0 0.0
    %1085 = vmatprep.subr.mxu0 0.0
    %1086 = vmatpush1.msra.mxu0 0.0
    %1087 = vmatprep.subr.mxu0 0.0
    %1088 = vmatpush1.msra.mxu0 0.0
    %1089 = vmatprep.subr.mxu0 0.0
    %1090 = vmatpush1.msra.mxu0 0.0
    %1091 = vmatprep.subr.mxu0 0.0
    %1092 = vmatpush1.msra.mxu0 0.0
    %1093 = vmatprep.subr.mxu0 0.0
    %1094 = vmatpush1.msra.mxu0 0.0
    %1095 = vmatprep.subr.mxu0 0.0
    %1096 = vmatpush1.msra.mxu0 0.0
    %1097 = vmatprep.subr.mxu0 0.0
    %1098 = vmatpush1.msra.mxu0 0.0
    %1099 = vmatprep.subr.mxu0 0.0
    %1100 = vmatpush1.msra.mxu0 0.0
    %1101 = vmatprep.subr.mxu0 0.0
    %1102 = vmatpush1.msra.mxu0 0.0
    %1103 = vmatprep.subr.mxu0 0.0
    %1104 = vmatpush1.msra.mxu0 0.0
    %1105 = vmatprep.subr.mxu0 0.0
    %1106 = vmatpush1.msra.mxu0 0.0
    %1107 = vmatprep.subr.mxu0 0.0
    %1108 = vmatpush1.msra.mxu0 0.0
    %1109 = vmatprep.subr.mxu0 0.0
    %1110 = vmatpush1.msra.mxu0 0.0
    %1111 = vmatprep.subr.mxu0 0.0
    %1112 = vmatpush1.msra.mxu0 0.0
    %1113 = vmatprep.subr.mxu0 0.0
    %1114 = vmatpush1.msra.mxu0 0.0
    %1115 = vmatprep.subr.mxu0 0.0
    %1116 = vmatpush1.msra.mxu0 0.0
    %1117 = vmatprep.subr.mxu0 0.0
    %1118 = vmatpush1.msra.mxu0 0.0
    %1119 = vmatprep.subr.mxu0 0.0
    %1120 = vmatpush1.msra.mxu0 0.0
    %1121 = vmatprep.subr.mxu0 0.0
    %1122 = vmatpush1.msra.mxu0 0.0
    %1123 = vmatprep.subr.mxu0 0.0
    %1124 = vmatpush1.msra.mxu0 0.0
    %1125 = vmatprep.subr.mxu0 0.0
    %1126 = vmatpush1.msra.mxu0 0.0
    %1127 = vmatprep.subr.mxu0 0.0
    %1128 = vmatpush1.msra.mxu0 0.0
    %1129 = vmatprep.subr.mxu0 0.0
    %1130 = vmatpush1.msra.mxu0 0.0
    %1131 = vmatprep.subr.mxu0 0.0
    %1132 = vmatpush1.msra.mxu0 0.0
    %1133 = vmatprep.subr.mxu0 0.0
    %1134 = vmatpush1.msra.mxu0 0.0
    %1135 = vmatprep.subr.mxu0 0.0
    %1136 = vmatpush1.msra.mxu0 0.0
    %1137 = vmatprep.subr.mxu0 0.0
    %1138 = vmatpush1.msra.mxu0 0.0
    %1139 = vmatprep.mubr.f32.mxu0 0.0
    %1140 = vmatmul.mubr.f32.gmra.mrb[0].mxu0 %v1073
    %v1141 = vpop.f32.mrb[0].mxu0
    %v1142 = vadd.f32 0.0, %v1141
    %v1143 = vpop.f32.mrb[0].mxu0
    %v1144 = vadd.f32 0.0, %v1143
    %1145 = vdwg.mxu0
    %v1147 = vsel %vm81, %v1062, 0
    %1149 = vmatprep.subr.mxu0 %v217
    %1150 = vmatpush1.msra.mxu0 %v216
    %1151 = vmatprep.subr.mxu0 %v219
    %1152 = vmatpush1.msra.mxu0 %v218
    %1153 = vmatprep.subr.mxu0 %v221
    %1154 = vmatpush1.msra.mxu0 %v220
    %1155 = vmatprep.subr.mxu0 %v223
    %1156 = vmatpush1.msra.mxu0 %v222
    %1157 = vmatprep.subr.mxu0 0.0
    %1158 = vmatpush1.msra.mxu0 0.0
    %1159 = vmatprep.subr.mxu0 0.0
    %1160 = vmatpush1.msra.mxu0 0.0
    %1161 = vmatprep.subr.mxu0 0.0
    %1162 = vmatpush1.msra.mxu0 0.0
    %1163 = vmatprep.subr.mxu0 0.0
    %1164 = vmatpush1.msra.mxu0 0.0
    %1165 = vmatprep.subr.mxu0 0.0
    %1166 = vmatpush1.msra.mxu0 0.0
    %1167 = vmatprep.subr.mxu0 0.0
    %1168 = vmatpush1.msra.mxu0 0.0
    %1169 = vmatprep.subr.mxu0 0.0
    %1170 = vmatpush1.msra.mxu0 0.0
    %1171 = vmatprep.subr.mxu0 0.0
    %1172 = vmatpush1.msra.mxu0 0.0
    %1173 = vmatprep.subr.mxu0 0.0
    %1174 = vmatpush1.msra.mxu0 0.0
    %1175 = vmatprep.subr.mxu0 0.0
    %1176 = vmatpush1.msra.mxu0 0.0
    %1177 = vmatprep.subr.mxu0 0.0
    %1178 = vmatpush1.msra.mxu0 0.0
    %1179 = vmatprep.subr.mxu0 0.0
    %1180 = vmatpush1.msra.mxu0 0.0
    %1181 = vmatprep.subr.mxu0 0.0
    %1182 = vmatpush1.msra.mxu0 0.0
    %1183 = vmatprep.subr.mxu0 0.0
    %1184 = vmatpush1.msra.mxu0 0.0
    %1185 = vmatprep.subr.mxu0 0.0
    %1186 = vmatpush1.msra.mxu0 0.0
    %1187 = vmatprep.subr.mxu0 0.0
    %1188 = vmatpush1.msra.mxu0 0.0
    %1189 = vmatprep.subr.mxu0 0.0
    %1190 = vmatpush1.msra.mxu0 0.0
    %1191 = vmatprep.subr.mxu0 0.0
    %1192 = vmatpush1.msra.mxu0 0.0
    %1193 = vmatprep.subr.mxu0 0.0
    %1194 = vmatpush1.msra.mxu0 0.0
    %1195 = vmatprep.subr.mxu0 0.0
    %1196 = vmatpush1.msra.mxu0 0.0
    %1197 = vmatprep.subr.mxu0 0.0
    %1198 = vmatpush1.msra.mxu0 0.0
    %1199 = vmatprep.subr.mxu0 0.0
    %1200 = vmatpush1.msra.mxu0 0.0
    %1201 = vmatprep.subr.mxu0 0.0
    %1202 = vmatpush1.msra.mxu0 0.0
    %1203 = vmatprep.subr.mxu0 0.0
    %1204 = vmatpush1.msra.mxu0 0.0
    %1205 = vmatprep.subr.mxu0 0.0
    %1206 = vmatpush1.msra.mxu0 0.0
    %1207 = vmatprep.subr.mxu0 0.0
    %1208 = vmatpush1.msra.mxu0 0.0
    %1209 = vmatprep.subr.mxu0 0.0
    %1210 = vmatpush1.msra.mxu0 0.0
    %1211 = vmatprep.subr.mxu0 0.0
    %1212 = vmatpush1.msra.mxu0 0.0
    %1213 = vmatprep.mubr.f32.mxu0 0.0
    %1214 = vmatmul.mubr.f32.gmra.mrb[0].mxu0 %v1147
    %v1215 = vpop.f32.mrb[0].mxu0
    %v1216 = vadd.f32 0.0, %v1215
    %v1217 = vpop.f32.mrb[0].mxu0
    %1218 = vdwg.mxu0
    %v1219 = vadd.f32 %v189, %v1142
    %v1220 = vxor.u32 %v1219, 2147483648
    %v1221 = vmul.f32 %v1220, 1.442695
    %v1222 = vpow.pop %v1221
    %v1223 = vadd.f32 %v1222, 1.0
    %v1224 = vrcp.pop %v1223
    %v1225 = vmul.f32 1.0, %v1224
    %v1226 = vadd.f32 %v1142, %v328
    %v1229 = vunpack.c.l.s4 1983009808
    %v1230 = vunpack.c.0.s8 %v1229
    %v1231 = vlaneseq
    %v1232 = vshrl.u32 %v1231, 7
    %v1233 = vsub.s32 %v1230, %v1232
    %v1234 = vrot.slane %v1226, %v1233
    %1235 = vrot.lane.b32.xlu0 %v1234, 64
    %v1236 = vpop.permute.xlu0 %1235
    %v1238 = vmul.f32 %v1225, %v1236
    %1240 = vrot.lane.b32.xlu0 %v1238, 64
    %v1241 = vpop.permute.xlu0 %1240
    %v1243 = vadd.f32 %v189, %v1241
    %v1244 = vtanh.pop %v1243
    %v1245 = vsub.f32 1.0, %v1225
    %1247 = vrot.lane.b32.xlu0 %v1244, 96
    %v1248 = vpop.permute.xlu0 %1247
    %v1250 = vmul.f32 %v1245, %v1248
    %v1251 = vmul.f32 %v1225, %v1022
    %v1252 = vadd.f32 %v1250, %v1251
    %v1253 = vadd.f32 %v1142, %v558
    %v1254 = vadd.f32 %v1144, %v558
    %1256 = vrot.lane.b32.xlu0 %v1216, 96
    %v1257 = vpop.permute.xlu0 %1256
    %v1259 = vadd.f32 %v1253, %v1257
    %v1260 = vxor.u32 %v1259, 2147483648
    %v1261 = vmul.f32 %v1260, 1.442695
    %v1262 = vpow.pop %v1261
    %v1263 = vadd.f32 %v1262, 1.0
    %v1264 = vrcp.pop %v1263
    %v1265 = vmul.f32 1.0, %v1264
    %v1266 = vadd.f32 %v1254, %v1257
    %v1267 = vxor.u32 %v1266, 2147483648
    %v1268 = vmul.f32 %v1267, 1.442695
    %v1269 = vpow.pop %v1268
    %v1270 = vadd.f32 %v1269, 1.0
    %v1271 = vrcp.pop %v1270
    %v1272 = vmul.f32 1.0, %v1271
    %v1273 = vadd.f32 %v1216, %v581
    %1275 = vrot.lane.b32.xlu0 %v1273, 32
    %v1276 = vpop.permute.xlu0 %1275
    %v1278 = vmul.f32 %v1265, %v1276
    %1280 = vrot.lane.b32.xlu0 %v1278, 64
    %v1281 = vpop.permute.xlu0 %1280
    %v1283 = vadd.f32 %v1254, %v1281
    %v1284 = vtanh.pop %v1283
    %v1285 = vsub.f32 1.0, %v1272
    %1287 = vrot.lane.b32.xlu0 %v1284, 96
    %v1288 = vpop.permute.xlu0 %1287
    %v1290 = vmul.f32 %v1285, %v1288
    %v1291 = vmul.f32 %v1272, %v1062
    %v1292 = vadd.f32 %v1290, %v1291
    %v1295 = vunpack.c.l.s4 1983009808
    %v1296 = vunpack.c.0.s8 %v1295
    %v1297 = vlaneseq
    %v1298 = vshrl.u32 %v1297, 7
    %v1299 = vsub.s32 %v1296, %v1298
    %v1300 = vrot.slane %v1252, %v1299
    %1301 = vrot.lane.b32.xlu0 %v1300, 96
    %v1302 = vpop.permute.xlu0 %1301
    %v1303 = vsel %vm81, %v1302, 0
    %1305 = vmatprep.subr.mxu0 %v208
    %1306 = vmatpush1.msra.mxu0 %v207
    %1307 = vmatprep.subr.mxu0 %v210
    %1308 = vmatpush1.msra.mxu0 %v209
    %1309 = vmatprep.subr.mxu0 %v212
    %1310 = vmatpush1.msra.mxu0 %v211
    %1311 = vmatprep.subr.mxu0 %v214
    %1312 = vmatpush1.msra.mxu0 %v213
    %1313 = vmatprep.subr.mxu0 0.0
    %1314 = vmatpush1.msra.mxu0 0.0
    %1315 = vmatprep.subr.mxu0 0.0
    %1316 = vmatpush1.msra.mxu0 0.0
    %1317 = vmatprep.subr.mxu0 0.0
    %1318 = vmatpush1.msra.mxu0 0.0
    %1319 = vmatprep.subr.mxu0 0.0
    %1320 = vmatpush1.msra.mxu0 0.0
    %1321 = vmatprep.subr.mxu0 0.0
    %1322 = vmatpush1.msra.mxu0 0.0
    %1323 = vmatprep.subr.mxu0 0.0
    %1324 = vmatpush1.msra.mxu0 0.0
    %1325 = vmatprep.subr.mxu0 0.0
    %1326 = vmatpush1.msra.mxu0 0.0
    %1327 = vmatprep.subr.mxu0 0.0
    %1328 = vmatpush1.msra.mxu0 0.0
    %1329 = vmatprep.subr.mxu0 0.0
    %1330 = vmatpush1.msra.mxu0 0.0
    %1331 = vmatprep.subr.mxu0 0.0
    %1332 = vmatpush1.msra.mxu0 0.0
    %1333 = vmatprep.subr.mxu0 0.0
    %1334 = vmatpush1.msra.mxu0 0.0
    %1335 = vmatprep.subr.mxu0 0.0
    %1336 = vmatpush1.msra.mxu0 0.0
    %1337 = vmatprep.subr.mxu0 0.0
    %1338 = vmatpush1.msra.mxu0 0.0
    %1339 = vmatprep.subr.mxu0 0.0
    %1340 = vmatpush1.msra.mxu0 0.0
    %1341 = vmatprep.subr.mxu0 0.0
    %1342 = vmatpush1.msra.mxu0 0.0
    %1343 = vmatprep.subr.mxu0 0.0
    %1344 = vmatpush1.msra.mxu0 0.0
    %1345 = vmatprep.subr.mxu0 0.0
    %1346 = vmatpush1.msra.mxu0 0.0
    %1347 = vmatprep.subr.mxu0 0.0
    %1348 = vmatpush1.msra.mxu0 0.0
    %1349 = vmatprep.subr.mxu0 0.0
    %1350 = vmatpush1.msra.mxu0 0.0
    %1351 = vmatprep.subr.mxu0 0.0
    %1352 = vmatpush1.msra.mxu0 0.0
    %1353 = vmatprep.subr.mxu0 0.0
    %1354 = vmatpush1.msra.mxu0 0.0
    %1355 = vmatprep.subr.mxu0 0.0
    %1356 = vmatpush1.msra.mxu0 0.0
    %1357 = vmatprep.subr.mxu0 0.0
    %1358 = vmatpush1.msra.mxu0 0.0
    %1359 = vmatprep.subr.mxu0 0.0
    %1360 = vmatpush1.msra.mxu0 0.0
    %1361 = vmatprep.subr.mxu0 0.0
    %1362 = vmatpush1.msra.mxu0 0.0
    %1363 = vmatprep.subr.mxu0 0.0
    %1364 = vmatpush1.msra.mxu0 0.0
    %1365 = vmatprep.subr.mxu0 0.0
    %1366 = vmatpush1.msra.mxu0 0.0
    %1367 = vmatprep.subr.mxu0 0.0
    %1368 = vmatpush1.msra.mxu0 0.0
    %1369 = vmatprep.mubr.f32.mxu0 0.0
    %1370 = vmatmul.mubr.f32.gmra.mrb[0].mxu0 %v1303
    %v1371 = vpop.f32.mrb[0].mxu0
    %v1372 = vadd.f32 0.0, %v1371
    %v1373 = vpop.f32.mrb[0].mxu0
    %v1374 = vadd.f32 0.0, %v1373
    %1375 = vdwg.mxu0
    %v1377 = vsel %vm81, %v1292, 0
    %1379 = vmatprep.subr.mxu0 %v217
    %1380 = vmatpush1.msra.mxu0 %v216
    %1381 = vmatprep.subr.mxu0 %v219
    %1382 = vmatpush1.msra.mxu0 %v218
    %1383 = vmatprep.subr.mxu0 %v221
    %1384 = vmatpush1.msra.mxu0 %v220
    %1385 = vmatprep.subr.mxu0 %v223
    %1386 = vmatpush1.msra.mxu0 %v222
    %1387 = vmatprep.subr.mxu0 0.0
    %1388 = vmatpush1.msra.mxu0 0.0
    %1389 = vmatprep.subr.mxu0 0.0
    %1390 = vmatpush1.msra.mxu0 0.0
    %1391 = vmatprep.subr.mxu0 0.0
    %1392 = vmatpush1.msra.mxu0 0.0
    %1393 = vmatprep.subr.mxu0 0.0
    %1394 = vmatpush1.msra.mxu0 0.0
    %1395 = vmatprep.subr.mxu0 0.0
    %1396 = vmatpush1.msra.mxu0 0.0
    %1397 = vmatprep.subr.mxu0 0.0
    %1398 = vmatpush1.msra.mxu0 0.0
    %1399 = vmatprep.subr.mxu0 0.0
    %1400 = vmatpush1.msra.mxu0 0.0
    %1401 = vmatprep.subr.mxu0 0.0
    %1402 = vmatpush1.msra.mxu0 0.0
    %1403 = vmatprep.subr.mxu0 0.0
    %1404 = vmatpush1.msra.mxu0 0.0
    %1405 = vmatprep.subr.mxu0 0.0
    %1406 = vmatpush1.msra.mxu0 0.0
    %1407 = vmatprep.subr.mxu0 0.0
    %1408 = vmatpush1.msra.mxu0 0.0
    %1409 = vmatprep.subr.mxu0 0.0
    %1410 = vmatpush1.msra.mxu0 0.0
    %1411 = vmatprep.subr.mxu0 0.0
    %1412 = vmatpush1.msra.mxu0 0.0
    %1413 = vmatprep.subr.mxu0 0.0
    %1414 = vmatpush1.msra.mxu0 0.0
    %1415 = vmatprep.subr.mxu0 0.0
    %1416 = vmatpush1.msra.mxu0 0.0
    %1417 = vmatprep.subr.mxu0 0.0
    %1418 = vmatpush1.msra.mxu0 0.0
    %1419 = vmatprep.subr.mxu0 0.0
    %1420 = vmatpush1.msra.mxu0 0.0
    %1421 = vmatprep.subr.mxu0 0.0
    %1422 = vmatpush1.msra.mxu0 0.0
    %1423 = vmatprep.subr.mxu0 0.0
    %1424 = vmatpush1.msra.mxu0 0.0
    %1425 = vmatprep.subr.mxu0 0.0
    %1426 = vmatpush1.msra.mxu0 0.0
    %1427 = vmatprep.subr.mxu0 0.0
    %1428 = vmatpush1.msra.mxu0 0.0
    %1429 = vmatprep.subr.mxu0 0.0
    %1430 = vmatpush1.msra.mxu0 0.0
    %1431 = vmatprep.subr.mxu0 0.0
    %1432 = vmatpush1.msra.mxu0 0.0
    %1433 = vmatprep.subr.mxu0 0.0
    %1434 = vmatpush1.msra.mxu0 0.0
    %1435 = vmatprep.subr.mxu0 0.0
    %1436 = vmatpush1.msra.mxu0 0.0
    %1437 = vmatprep.subr.mxu0 0.0
    %1438 = vmatpush1.msra.mxu0 0.0
    %1439 = vmatprep.subr.mxu0 0.0
    %1440 = vmatpush1.msra.mxu0 0.0
    %1441 = vmatprep.subr.mxu0 0.0
    %1442 = vmatpush1.msra.mxu0 0.0
    %1443 = vmatprep.mubr.f32.mxu0 0.0
    %1444 = vmatmul.mubr.f32.gmra.mrb[0].mxu0 %v1377
    %v1445 = vpop.f32.mrb[0].mxu0
    %v1446 = vadd.f32 0.0, %v1445
    %v1447 = vpop.f32.mrb[0].mxu0
    %1448 = vdwg.mxu0
    %v1449 = vadd.f32 %v197, %v1372
    %v1450 = vxor.u32 %v1449, 2147483648
    %v1451 = vmul.f32 %v1450, 1.442695
    %v1452 = vpow.pop %v1451
    %v1453 = vadd.f32 %v1452, 1.0
    %v1454 = vrcp.pop %v1453
    %v1455 = vmul.f32 1.0, %v1454
    %v1456 = vadd.f32 %v1372, %v328
    %v1459 = vunpack.c.l.s4 1983009808
    %v1460 = vunpack.c.0.s8 %v1459
    %v1461 = vlaneseq
    %v1462 = vshrl.u32 %v1461, 7
    %v1463 = vsub.s32 %v1460, %v1462
    %v1464 = vrot.slane %v1456, %v1463
    %1465 = vrot.lane.b32.xlu0 %v1464, 64
    %v1466 = vpop.permute.xlu0 %1465
    %v1468 = vmul.f32 %v1455, %v1466
    %1470 = vrot.lane.b32.xlu0 %v1468, 64
    %v1471 = vpop.permute.xlu0 %1470
    %v1473 = vadd.f32 %v197, %v1471
    %v1474 = vtanh.pop %v1473
    %v1475 = vsub.f32 1.0, %v1455
    %1477 = vrot.lane.b32.xlu0 %v1474, 96
    %v1478 = vpop.permute.xlu0 %1477
    %v1480 = vmul.f32 %v1475, %v1478
    %v1481 = vmul.f32 %v1455, %v1252
    %v1482 = vadd.f32 %v1480, %v1481
    %v1483 = vadd.f32 %v1372, %v558
    %v1484 = vadd.f32 %v1374, %v558
    %1486 = vrot.lane.b32.xlu0 %v1446, 96
    %v1487 = vpop.permute.xlu0 %1486
    %v1489 = vadd.f32 %v1483, %v1487
    %v1490 = vxor.u32 %v1489, 2147483648
    %v1491 = vmul.f32 %v1490, 1.442695
    %v1492 = vpow.pop %v1491
    %v1493 = vadd.f32 %v1492, 1.0
    %v1494 = vrcp.pop %v1493
    %v1495 = vmul.f32 1.0, %v1494
    %v1496 = vadd.f32 %v1484, %v1487
    %v1497 = vxor.u32 %v1496, 2147483648
    %v1498 = vmul.f32 %v1497, 1.442695
    %v1499 = vpow.pop %v1498
    %v1500 = vadd.f32 %v1499, 1.0
    %v1501 = vrcp.pop %v1500
    %v1502 = vmul.f32 1.0, %v1501
    %v1503 = vadd.f32 %v1446, %v581
    %1505 = vrot.lane.b32.xlu0 %v1503, 32
    %v1506 = vpop.permute.xlu0 %1505
    %v1508 = vmul.f32 %v1495, %v1506
    %1510 = vrot.lane.b32.xlu0 %v1508, 64
    %v1511 = vpop.permute.xlu0 %1510
    %v1513 = vadd.f32 %v1484, %v1511
    %v1514 = vtanh.pop %v1513
    %v1515 = vsub.f32 1.0, %v1502
    %1517 = vrot.lane.b32.xlu0 %v1514, 96
    %v1518 = vpop.permute.xlu0 %1517
    %v1520 = vmul.f32 %v1515, %v1518
    %v1521 = vmul.f32 %v1502, %v1292
    %v1522 = vadd.f32 %v1520, %v1521
    %v1525 = vunpack.c.l.s4 1983009808
    %v1526 = vunpack.c.0.s8 %v1525
    %v1527 = vlaneseq
    %v1528 = vshrl.u32 %v1527, 7
    %v1529 = vsub.s32 %v1526, %v1528
    %v1530 = vrot.slane %v1482, %v1529
    %1531 = vrot.lane.b32.xlu0 %v1530, 96
    %v1532 = vpop.permute.xlu0 %1531
    %v1533 = vsel %vm81, %v1532, 0
    %1535 = vmatprep.subr.mxu0 %v208
    %1536 = vmatpush1.msra.mxu0 %v207
    %1537 = vmatprep.subr.mxu0 %v210
    %1538 = vmatpush1.msra.mxu0 %v209
    %1539 = vmatprep.subr.mxu0 %v212
    %1540 = vmatpush1.msra.mxu0 %v211
    %1541 = vmatprep.subr.mxu0 %v214
    %1542 = vmatpush1.msra.mxu0 %v213
    %1543 = vmatprep.subr.mxu0 0.0
    %1544 = vmatpush1.msra.mxu0 0.0
    %1545 = vmatprep.subr.mxu0 0.0
    %1546 = vmatpush1.msra.mxu0 0.0
    %1547 = vmatprep.subr.mxu0 0.0
    %1548 = vmatpush1.msra.mxu0 0.0
    %1549 = vmatprep.subr.mxu0 0.0
    %1550 = vmatpush1.msra.mxu0 0.0
    %1551 = vmatprep.subr.mxu0 0.0
    %1552 = vmatpush1.msra.mxu0 0.0
    %1553 = vmatprep.subr.mxu0 0.0
    %1554 = vmatpush1.msra.mxu0 0.0
    %1555 = vmatprep.subr.mxu0 0.0
    %1556 = vmatpush1.msra.mxu0 0.0
    %1557 = vmatprep.subr.mxu0 0.0
    %1558 = vmatpush1.msra.mxu0 0.0
    %1559 = vmatprep.subr.mxu0 0.0
    %1560 = vmatpush1.msra.mxu0 0.0
    %1561 = vmatprep.subr.mxu0 0.0
    %1562 = vmatpush1.msra.mxu0 0.0
    %1563 = vmatprep.subr.mxu0 0.0
    %1564 = vmatpush1.msra.mxu0 0.0
    %1565 = vmatprep.subr.mxu0 0.0
    %1566 = vmatpush1.msra.mxu0 0.0
    %1567 = vmatprep.subr.mxu0 0.0
    %1568 = vmatpush1.msra.mxu0 0.0
    %1569 = vmatprep.subr.mxu0 0.0
    %1570 = vmatpush1.msra.mxu0 0.0
    %1571 = vmatprep.subr.mxu0 0.0
    %1572 = vmatpush1.msra.mxu0 0.0
    %1573 = vmatprep.subr.mxu0 0.0
    %1574 = vmatpush1.msra.mxu0 0.0
    %1575 = vmatprep.subr.mxu0 0.0
    %1576 = vmatpush1.msra.mxu0 0.0
    %1577 = vmatprep.subr.mxu0 0.0
    %1578 = vmatpush1.msra.mxu0 0.0
    %1579 = vmatprep.subr.mxu0 0.0
    %1580 = vmatpush1.msra.mxu0 0.0
    %1581 = vmatprep.subr.mxu0 0.0
    %1582 = vmatpush1.msra.mxu0 0.0
    %1583 = vmatprep.subr.mxu0 0.0
    %1584 = vmatpush1.msra.mxu0 0.0
    %1585 = vmatprep.subr.mxu0 0.0
    %1586 = vmatpush1.msra.mxu0 0.0
    %1587 = vmatprep.subr.mxu0 0.0
    %1588 = vmatpush1.msra.mxu0 0.0
    %1589 = vmatprep.subr.mxu0 0.0
    %1590 = vmatpush1.msra.mxu0 0.0
    %1591 = vmatprep.subr.mxu0 0.0
    %1592 = vmatpush1.msra.mxu0 0.0
    %1593 = vmatprep.subr.mxu0 0.0
    %1594 = vmatpush1.msra.mxu0 0.0
    %1595 = vmatprep.subr.mxu0 0.0
    %1596 = vmatpush1.msra.mxu0 0.0
    %1597 = vmatprep.subr.mxu0 0.0
    %1598 = vmatpush1.msra.mxu0 0.0
    %1599 = vmatprep.mubr.f32.mxu0 0.0
    %1600 = vmatmul.mubr.f32.gmra.mrb[0].mxu0 %v1533
    %v1601 = vpop.f32.mrb[0].mxu0
    %v1602 = vadd.f32 0.0, %v1601
    %v1603 = vpop.f32.mrb[0].mxu0
    %v1604 = vadd.f32 0.0, %v1603
    %1605 = vdwg.mxu0
    %v1607 = vsel %vm81, %v1522, 0
    %1609 = vmatprep.subr.mxu0 %v217
    %1610 = vmatpush1.msra.mxu0 %v216
    %1611 = vmatprep.subr.mxu0 %v219
    %1612 = vmatpush1.msra.mxu0 %v218
    %1613 = vmatprep.subr.mxu0 %v221
    %1614 = vmatpush1.msra.mxu0 %v220
    %1615 = vmatprep.subr.mxu0 %v223
    %1616 = vmatpush1.msra.mxu0 %v222
    %1617 = vmatprep.subr.mxu0 0.0
    %1618 = vmatpush1.msra.mxu0 0.0
    %1619 = vmatprep.subr.mxu0 0.0
    %1620 = vmatpush1.msra.mxu0 0.0
    %1621 = vmatprep.subr.mxu0 0.0
    %1622 = vmatpush1.msra.mxu0 0.0
    %1623 = vmatprep.subr.mxu0 0.0
    %1624 = vmatpush1.msra.mxu0 0.0
    %1625 = vmatprep.subr.mxu0 0.0
    %1626 = vmatpush1.msra.mxu0 0.0
    %1627 = vmatprep.subr.mxu0 0.0
    %1628 = vmatpush1.msra.mxu0 0.0
    %1629 = vmatprep.subr.mxu0 0.0
    %1630 = vmatpush1.msra.mxu0 0.0
    %1631 = vmatprep.subr.mxu0 0.0
    %1632 = vmatpush1.msra.mxu0 0.0
    %1633 = vmatprep.subr.mxu0 0.0
    %1634 = vmatpush1.msra.mxu0 0.0
    %1635 = vmatprep.subr.mxu0 0.0
    %1636 = vmatpush1.msra.mxu0 0.0
    %1637 = vmatprep.subr.mxu0 0.0
    %1638 = vmatpush1.msra.mxu0 0.0
    %1639 = vmatprep.subr.mxu0 0.0
    %1640 = vmatpush1.msra.mxu0 0.0
    %1641 = vmatprep.subr.mxu0 0.0
    %1642 = vmatpush1.msra.mxu0 0.0
    %1643 = vmatprep.subr.mxu0 0.0
    %1644 = vmatpush1.msra.mxu0 0.0
    %1645 = vmatprep.subr.mxu0 0.0
    %1646 = vmatpush1.msra.mxu0 0.0
    %1647 = vmatprep.subr.mxu0 0.0
    %1648 = vmatpush1.msra.mxu0 0.0
    %1649 = vmatprep.subr.mxu0 0.0
    %1650 = vmatpush1.msra.mxu0 0.0
    %1651 = vmatprep.subr.mxu0 0.0
    %1652 = vmatpush1.msra.mxu0 0.0
    %1653 = vmatprep.subr.mxu0 0.0
    %1654 = vmatpush1.msra.mxu0 0.0
    %1655 = vmatprep.subr.mxu0 0.0
    %1656 = vmatpush1.msra.mxu0 0.0
    %1657 = vmatprep.subr.mxu0 0.0
    %1658 = vmatpush1.msra.mxu0 0.0
    %1659 = vmatprep.subr.mxu0 0.0
    %1660 = vmatpush1.msra.mxu0 0.0
    %1661 = vmatprep.subr.mxu0 0.0
    %1662 = vmatpush1.msra.mxu0 0.0
    %1663 = vmatprep.subr.mxu0 0.0
    %1664 = vmatpush1.msra.mxu0 0.0
    %1665 = vmatprep.subr.mxu0 0.0
    %1666 = vmatpush1.msra.mxu0 0.0
    %1667 = vmatprep.subr.mxu0 0.0
    %1668 = vmatpush1.msra.mxu0 0.0
    %1669 = vmatprep.subr.mxu0 0.0
    %1670 = vmatpush1.msra.mxu0 0.0
    %1671 = vmatprep.subr.mxu0 0.0
    %1672 = vmatpush1.msra.mxu0 0.0
    %1673 = vmatprep.mubr.f32.mxu0 0.0
    %1674 = vmatmul.mubr.f32.gmra.mrb[0].mxu0 %v1607
    %v1675 = vpop.f32.mrb[0].mxu0
    %v1676 = vadd.f32 0.0, %v1675
    %v1677 = vpop.f32.mrb[0].mxu0
    %1678 = vdwg.mxu0
    %v1679 = vadd.f32 %v196, %v1602
    %v1680 = vxor.u32 %v1679, 2147483648
    %v1681 = vmul.f32 %v1680, 1.442695
    %v1682 = vpow.pop %v1681
    %v1683 = vadd.f32 %v1682, 1.0
    %v1684 = vrcp.pop %v1683
    %v1685 = vmul.f32 1.0, %v1684
    %v1686 = vadd.f32 %v1602, %v328
    %v1689 = vunpack.c.l.s4 1983009808
    %v1690 = vunpack.c.0.s8 %v1689
    %v1691 = vlaneseq
    %v1692 = vshrl.u32 %v1691, 7
    %v1693 = vsub.s32 %v1690, %v1692
    %v1694 = vrot.slane %v1686, %v1693
    %1695 = vrot.lane.b32.xlu0 %v1694, 64
    %v1696 = vpop.permute.xlu0 %1695
    %v1698 = vmul.f32 %v1685, %v1696
    %1700 = vrot.lane.b32.xlu0 %v1698, 64
    %v1701 = vpop.permute.xlu0 %1700
    %v1703 = vadd.f32 %v196, %v1701
    %v1704 = vtanh.pop %v1703
    %v1705 = vsub.f32 1.0, %v1685
    %1707 = vrot.lane.b32.xlu0 %v1704, 96
    %v1708 = vpop.permute.xlu0 %1707
    %v1710 = vmul.f32 %v1705, %v1708
    %v1711 = vmul.f32 %v1685, %v1482
    %v1712 = vadd.f32 %v1710, %v1711
    %v1713 = vadd.f32 %v1602, %v558
    %v1714 = vadd.f32 %v1604, %v558
    %1716 = vrot.lane.b32.xlu0 %v1676, 96
    %v1717 = vpop.permute.xlu0 %1716
    %v1719 = vadd.f32 %v1713, %v1717
    %v1720 = vxor.u32 %v1719, 2147483648
    %v1721 = vmul.f32 %v1720, 1.442695
    %v1722 = vpow.pop %v1721
    %v1723 = vadd.f32 %v1722, 1.0
    %v1724 = vrcp.pop %v1723
    %v1725 = vmul.f32 1.0, %v1724
    %v1726 = vadd.f32 %v1714, %v1717
    %v1727 = vxor.u32 %v1726, 2147483648
    %v1728 = vmul.f32 %v1727, 1.442695
    %v1729 = vpow.pop %v1728
    %v1730 = vadd.f32 %v1729, 1.0
    %v1731 = vrcp.pop %v1730
    %v1732 = vmul.f32 1.0, %v1731
    %v1733 = vadd.f32 %v1676, %v581
    %1735 = vrot.lane.b32.xlu0 %v1733, 32
    %v1736 = vpop.permute.xlu0 %1735
    %v1738 = vmul.f32 %v1725, %v1736
    %1740 = vrot.lane.b32.xlu0 %v1738, 64
    %v1741 = vpop.permute.xlu0 %1740
    %v1743 = vadd.f32 %v1714, %v1741
    %v1744 = vtanh.pop %v1743
    %v1745 = vsub.f32 1.0, %v1732
    %1747 = vrot.lane.b32.xlu0 %v1744, 96
    %v1748 = vpop.permute.xlu0 %1747
    %v1750 = vmul.f32 %v1745, %v1748
    %v1751 = vmul.f32 %v1732, %v1522
    %v1752 = vadd.f32 %v1750, %v1751
    %v1755 = vunpack.c.l.s4 1983009808
    %v1756 = vunpack.c.0.s8 %v1755
    %v1757 = vlaneseq
    %v1758 = vshrl.u32 %v1757, 7
    %v1759 = vsub.s32 %v1756, %v1758
    %v1760 = vrot.slane %v1712, %v1759
    %1761 = vrot.lane.b32.xlu0 %v1760, 96
    %v1762 = vpop.permute.xlu0 %1761
    %v1763 = vsel %vm81, %v1762, 0
    %1765 = vmatprep.subr.mxu0 %v208
    %1766 = vmatpush1.msra.mxu0 %v207
    %1767 = vmatprep.subr.mxu0 %v210
    %1768 = vmatpush1.msra.mxu0 %v209
    %1769 = vmatprep.subr.mxu0 %v212
    %1770 = vmatpush1.msra.mxu0 %v211
    %1771 = vmatprep.subr.mxu0 %v214
    %1772 = vmatpush1.msra.mxu0 %v213
    %1773 = vmatprep.subr.mxu0 0.0
    %1774 = vmatpush1.msra.mxu0 0.0
    %1775 = vmatprep.subr.mxu0 0.0
    %1776 = vmatpush1.msra.mxu0 0.0
    %1777 = vmatprep.subr.mxu0 0.0
    %1778 = vmatpush1.msra.mxu0 0.0
    %1779 = vmatprep.subr.mxu0 0.0
    %1780 = vmatpush1.msra.mxu0 0.0
    %1781 = vmatprep.subr.mxu0 0.0
    %1782 = vmatpush1.msra.mxu0 0.0
    %1783 = vmatprep.subr.mxu0 0.0
    %1784 = vmatpush1.msra.mxu0 0.0
    %1785 = vmatprep.subr.mxu0 0.0
    %1786 = vmatpush1.msra.mxu0 0.0
    %1787 = vmatprep.subr.mxu0 0.0
    %1788 = vmatpush1.msra.mxu0 0.0
    %1789 = vmatprep.subr.mxu0 0.0
    %1790 = vmatpush1.msra.mxu0 0.0
    %1791 = vmatprep.subr.mxu0 0.0
    %1792 = vmatpush1.msra.mxu0 0.0
    %1793 = vmatprep.subr.mxu0 0.0
    %1794 = vmatpush1.msra.mxu0 0.0
    %1795 = vmatprep.subr.mxu0 0.0
    %1796 = vmatpush1.msra.mxu0 0.0
    %1797 = vmatprep.subr.mxu0 0.0
    %1798 = vmatpush1.msra.mxu0 0.0
    %1799 = vmatprep.subr.mxu0 0.0
    %1800 = vmatpush1.msra.mxu0 0.0
    %1801 = vmatprep.subr.mxu0 0.0
    %1802 = vmatpush1.msra.mxu0 0.0
    %1803 = vmatprep.subr.mxu0 0.0
    %1804 = vmatpush1.msra.mxu0 0.0
    %1805 = vmatprep.subr.mxu0 0.0
    %1806 = vmatpush1.msra.mxu0 0.0
    %1807 = vmatprep.subr.mxu0 0.0
    %1808 = vmatpush1.msra.mxu0 0.0
    %1809 = vmatprep.subr.mxu0 0.0
    %1810 = vmatpush1.msra.mxu0 0.0
    %1811 = vmatprep.subr.mxu0 0.0
    %1812 = vmatpush1.msra.mxu0 0.0
    %1813 = vmatprep.subr.mxu0 0.0
    %1814 = vmatpush1.msra.mxu0 0.0
    %1815 = vmatprep.subr.mxu0 0.0
    %1816 = vmatpush1.msra.mxu0 0.0
    %1817 = vmatprep.subr.mxu0 0.0
    %1818 = vmatpush1.msra.mxu0 0.0
    %1819 = vmatprep.subr.mxu0 0.0
    %1820 = vmatpush1.msra.mxu0 0.0
    %1821 = vmatprep.subr.mxu0 0.0
    %1822 = vmatpush1.msra.mxu0 0.0
    %1823 = vmatprep.subr.mxu0 0.0
    %1824 = vmatpush1.msra.mxu0 0.0
    %1825 = vmatprep.subr.mxu0 0.0
    %1826 = vmatpush1.msra.mxu0 0.0
    %1827 = vmatprep.subr.mxu0 0.0
    %1828 = vmatpush1.msra.mxu0 0.0
    %1829 = vmatprep.mubr.f32.mxu0 0.0
    %1830 = vmatmul.mubr.f32.gmra.mrb[0].mxu0 %v1763
    %v1831 = vpop.f32.mrb[0].mxu0
    %v1832 = vadd.f32 0.0, %v1831
    %v1833 = vpop.f32.mrb[0].mxu0
    %v1834 = vadd.f32 0.0, %v1833
    %1835 = vdwg.mxu0
    %v1837 = vsel %vm81, %v1752, 0
    %1839 = vmatprep.subr.mxu0 %v217
    %1840 = vmatpush1.msra.mxu0 %v216
    %1841 = vmatprep.subr.mxu0 %v219
    %1842 = vmatpush1.msra.mxu0 %v218
    %1843 = vmatprep.subr.mxu0 %v221
    %1844 = vmatpush1.msra.mxu0 %v220
    %1845 = vmatprep.subr.mxu0 %v223
    %1846 = vmatpush1.msra.mxu0 %v222
    %1847 = vmatprep.subr.mxu0 0.0
    %1848 = vmatpush1.msra.mxu0 0.0
    %1849 = vmatprep.subr.mxu0 0.0
    %1850 = vmatpush1.msra.mxu0 0.0
    %1851 = vmatprep.subr.mxu0 0.0
    %1852 = vmatpush1.msra.mxu0 0.0
    %1853 = vmatprep.subr.mxu0 0.0
    %1854 = vmatpush1.msra.mxu0 0.0
    %1855 = vmatprep.subr.mxu0 0.0
    %1856 = vmatpush1.msra.mxu0 0.0
    %1857 = vmatprep.subr.mxu0 0.0
    %1858 = vmatpush1.msra.mxu0 0.0
    %1859 = vmatprep.subr.mxu0 0.0
    %1860 = vmatpush1.msra.mxu0 0.0
    %1861 = vmatprep.subr.mxu0 0.0
    %1862 = vmatpush1.msra.mxu0 0.0
    %1863 = vmatprep.subr.mxu0 0.0
    %1864 = vmatpush1.msra.mxu0 0.0
    %1865 = vmatprep.subr.mxu0 0.0
    %1866 = vmatpush1.msra.mxu0 0.0
    %1867 = vmatprep.subr.mxu0 0.0
    %1868 = vmatpush1.msra.mxu0 0.0
    %1869 = vmatprep.subr.mxu0 0.0
    %1870 = vmatpush1.msra.mxu0 0.0
    %1871 = vmatprep.subr.mxu0 0.0
    %1872 = vmatpush1.msra.mxu0 0.0
    %1873 = vmatprep.subr.mxu0 0.0
    %1874 = vmatpush1.msra.mxu0 0.0
    %1875 = vmatprep.subr.mxu0 0.0
    %1876 = vmatpush1.msra.mxu0 0.0
    %1877 = vmatprep.subr.mxu0 0.0
    %1878 = vmatpush1.msra.mxu0 0.0
    %1879 = vmatprep.subr.mxu0 0.0
    %1880 = vmatpush1.msra.mxu0 0.0
    %1881 = vmatprep.subr.mxu0 0.0
    %1882 = vmatpush1.msra.mxu0 0.0
    %1883 = vmatprep.subr.mxu0 0.0
    %1884 = vmatpush1.msra.mxu0 0.0
    %1885 = vmatprep.subr.mxu0 0.0
    %1886 = vmatpush1.msra.mxu0 0.0
    %1887 = vmatprep.subr.mxu0 0.0
    %1888 = vmatpush1.msra.mxu0 0.0
    %1889 = vmatprep.subr.mxu0 0.0
    %1890 = vmatpush1.msra.mxu0 0.0
    %1891 = vmatprep.subr.mxu0 0.0
    %1892 = vmatpush1.msra.mxu0 0.0
    %1893 = vmatprep.subr.mxu0 0.0
    %1894 = vmatpush1.msra.mxu0 0.0
    %1895 = vmatprep.subr.mxu0 0.0
    %1896 = vmatpush1.msra.mxu0 0.0
    %1897 = vmatprep.subr.mxu0 0.0
    %1898 = vmatpush1.msra.mxu0 0.0
    %1899 = vmatprep.subr.mxu0 0.0
    %1900 = vmatpush1.msra.mxu0 0.0
    %1901 = vmatprep.subr.mxu0 0.0
    %1902 = vmatpush1.msra.mxu0 0.0
    %1903 = vmatprep.mubr.f32.mxu0 0.0
    %1904 = vmatmul.mubr.f32.gmra.mrb[0].mxu0 %v1837
    %v1905 = vpop.f32.mrb[0].mxu0
    %v1906 = vadd.f32 0.0, %v1905
    %v1907 = vpop.f32.mrb[0].mxu0
    %1908 = vdwg.mxu0
    %v1909 = vadd.f32 %v198, %v1832
    %v1910 = vxor.u32 %v1909, 2147483648
    %v1911 = vmul.f32 %v1910, 1.442695
    %v1912 = vpow.pop %v1911
    %v1913 = vadd.f32 %v1912, 1.0
    %v1914 = vrcp.pop %v1913
    %v1915 = vmul.f32 1.0, %v1914
    %v1916 = vadd.f32 %v1832, %v328
    %v1919 = vunpack.c.l.s4 1983009808
    %v1920 = vunpack.c.0.s8 %v1919
    %v1921 = vlaneseq
    %v1922 = vshrl.u32 %v1921, 7
    %v1923 = vsub.s32 %v1920, %v1922
    %v1924 = vrot.slane %v1916, %v1923
    %1925 = vrot.lane.b32.xlu0 %v1924, 64
    %v1926 = vpop.permute.xlu0 %1925
    %v1928 = vmul.f32 %v1915, %v1926
    %1930 = vrot.lane.b32.xlu0 %v1928, 64
    %v1931 = vpop.permute.xlu0 %1930
    %v1933 = vadd.f32 %v198, %v1931
    %v1934 = vtanh.pop %v1933
    %v1935 = vsub.f32 1.0, %v1915
    %1937 = vrot.lane.b32.xlu0 %v1934, 96
    %v1938 = vpop.permute.xlu0 %1937
    %v1940 = vmul.f32 %v1935, %v1938
    %v1941 = vmul.f32 %v1915, %v1712
    %v1942 = vadd.f32 %v1940, %v1941
    %v1943 = vadd.f32 %v1832, %v558
    %v1944 = vadd.f32 %v1834, %v558
    %1946 = vrot.lane.b32.xlu0 %v1906, 96
    %v1947 = vpop.permute.xlu0 %1946
    %v1949 = vadd.f32 %v1943, %v1947
    %v1950 = vxor.u32 %v1949, 2147483648
    %v1951 = vmul.f32 %v1950, 1.442695
    %v1952 = vpow.pop %v1951
    %v1953 = vadd.f32 %v1952, 1.0
    %v1954 = vrcp.pop %v1953
    %v1955 = vmul.f32 1.0, %v1954
    %v1956 = vadd.f32 %v1944, %v1947
    %v1957 = vxor.u32 %v1956, 2147483648
    %v1958 = vmul.f32 %v1957, 1.442695
    %v1959 = vpow.pop %v1958
    %v1960 = vadd.f32 %v1959, 1.0
    %v1961 = vrcp.pop %v1960
    %v1962 = vmul.f32 1.0, %v1961
    %v1963 = vadd.f32 %v1906, %v581
    %1965 = vrot.lane.b32.xlu0 %v1963, 32
    %v1966 = vpop.permute.xlu0 %1965
    %v1968 = vmul.f32 %v1955, %v1966
    %1970 = vrot.lane.b32.xlu0 %v1968, 64
    %v1971 = vpop.permute.xlu0 %1970
    %v1973 = vadd.f32 %v1944, %v1971
    %v1974 = vtanh.pop %v1973
    %v1975 = vsub.f32 1.0, %v1962
    %1977 = vrot.lane.b32.xlu0 %v1974, 96
    %v1978 = vpop.permute.xlu0 %1977
    %v1980 = vmul.f32 %v1975, %v1978
    %v1981 = vmul.f32 %v1962, %v1752
    %v1982 = vadd.f32 %v1980, %v1981
    %v1985 = vunpack.c.l.s4 1983009808
    %v1986 = vunpack.c.0.s8 %v1985
    %v1987 = vlaneseq
    %v1988 = vshrl.u32 %v1987, 7
    %v1989 = vsub.s32 %v1986, %v1988
    %v1990 = vrot.slane %v1942, %v1989
    %1991 = vrot.lane.b32.xlu0 %v1990, 96
    %v1992 = vpop.permute.xlu0 %1991
    %v1993 = vsel %vm81, %v1992, 0
    %1995 = vmatprep.subr.mxu0 %v208
    %1996 = vmatpush1.msra.mxu0 %v207
    %1997 = vmatprep.subr.mxu0 %v210
    %1998 = vmatpush1.msra.mxu0 %v209
    %1999 = vmatprep.subr.mxu0 %v212
    %2000 = vmatpush1.msra.mxu0 %v211
    %2001 = vmatprep.subr.mxu0 %v214
    %2002 = vmatpush1.msra.mxu0 %v213
    %2003 = vmatprep.subr.mxu0 0.0
    %2004 = vmatpush1.msra.mxu0 0.0
    %2005 = vmatprep.subr.mxu0 0.0
    %2006 = vmatpush1.msra.mxu0 0.0
    %2007 = vmatprep.subr.mxu0 0.0
    %2008 = vmatpush1.msra.mxu0 0.0
    %2009 = vmatprep.subr.mxu0 0.0
    %2010 = vmatpush1.msra.mxu0 0.0
    %2011 = vmatprep.subr.mxu0 0.0
    %2012 = vmatpush1.msra.mxu0 0.0
    %2013 = vmatprep.subr.mxu0 0.0
    %2014 = vmatpush1.msra.mxu0 0.0
    %2015 = vmatprep.subr.mxu0 0.0
    %2016 = vmatpush1.msra.mxu0 0.0
    %2017 = vmatprep.subr.mxu0 0.0
    %2018 = vmatpush1.msra.mxu0 0.0
    %2019 = vmatprep.subr.mxu0 0.0
    %2020 = vmatpush1.msra.mxu0 0.0
    %2021 = vmatprep.subr.mxu0 0.0
    %2022 = vmatpush1.msra.mxu0 0.0
    %2023 = vmatprep.subr.mxu0 0.0
    %2024 = vmatpush1.msra.mxu0 0.0
    %2025 = vmatprep.subr.mxu0 0.0
    %2026 = vmatpush1.msra.mxu0 0.0
    %2027 = vmatprep.subr.mxu0 0.0
    %2028 = vmatpush1.msra.mxu0 0.0
    %2029 = vmatprep.subr.mxu0 0.0
    %2030 = vmatpush1.msra.mxu0 0.0
    %2031 = vmatprep.subr.mxu0 0.0
    %2032 = vmatpush1.msra.mxu0 0.0
    %2033 = vmatprep.subr.mxu0 0.0
    %2034 = vmatpush1.msra.mxu0 0.0
    %2035 = vmatprep.subr.mxu0 0.0
    %2036 = vmatpush1.msra.mxu0 0.0
    %2037 = vmatprep.subr.mxu0 0.0
    %2038 = vmatpush1.msra.mxu0 0.0
    %2039 = vmatprep.subr.mxu0 0.0
    %2040 = vmatpush1.msra.mxu0 0.0
    %2041 = vmatprep.subr.mxu0 0.0
    %2042 = vmatpush1.msra.mxu0 0.0
    %2043 = vmatprep.subr.mxu0 0.0
    %2044 = vmatpush1.msra.mxu0 0.0
    %2045 = vmatprep.subr.mxu0 0.0
    %2046 = vmatpush1.msra.mxu0 0.0
    %2047 = vmatprep.subr.mxu0 0.0
    %2048 = vmatpush1.msra.mxu0 0.0
    %2049 = vmatprep.subr.mxu0 0.0
    %2050 = vmatpush1.msra.mxu0 0.0
    %2051 = vmatprep.subr.mxu0 0.0
    %2052 = vmatpush1.msra.mxu0 0.0
    %2053 = vmatprep.subr.mxu0 0.0
    %2054 = vmatpush1.msra.mxu0 0.0
    %2055 = vmatprep.subr.mxu0 0.0
    %2056 = vmatpush1.msra.mxu0 0.0
    %2057 = vmatprep.subr.mxu0 0.0
    %2058 = vmatpush1.msra.mxu0 0.0
    %2059 = vmatprep.mubr.f32.mxu0 0.0
    %2060 = vmatmul.mubr.f32.gmra.mrb[0].mxu0 %v1993
    %v2061 = vpop.f32.mrb[0].mxu0
    %v2062 = vadd.f32 0.0, %v2061
    %v2063 = vpop.f32.mrb[0].mxu0
    %v2064 = vadd.f32 0.0, %v2063
    %2065 = vdwg.mxu0
    %v2067 = vsel %vm81, %v1982, 0
    %2069 = vmatprep.subr.mxu0 %v217
    %2070 = vmatpush1.msra.mxu0 %v216
    %2071 = vmatprep.subr.mxu0 %v219
    %2072 = vmatpush1.msra.mxu0 %v218
    %2073 = vmatprep.subr.mxu0 %v221
    %2074 = vmatpush1.msra.mxu0 %v220
    %2075 = vmatprep.subr.mxu0 %v223
    %2076 = vmatpush1.msra.mxu0 %v222
    %2077 = vmatprep.subr.mxu0 0.0
    %2078 = vmatpush1.msra.mxu0 0.0
    %2079 = vmatprep.subr.mxu0 0.0
    %2080 = vmatpush1.msra.mxu0 0.0
    %2081 = vmatprep.subr.mxu0 0.0
    %2082 = vmatpush1.msra.mxu0 0.0
    %2083 = vmatprep.subr.mxu0 0.0
    %2084 = vmatpush1.msra.mxu0 0.0
    %2085 = vmatprep.subr.mxu0 0.0
    %2086 = vmatpush1.msra.mxu0 0.0
    %2087 = vmatprep.subr.mxu0 0.0
    %2088 = vmatpush1.msra.mxu0 0.0
    %2089 = vmatprep.subr.mxu0 0.0
    %2090 = vmatpush1.msra.mxu0 0.0
    %2091 = vmatprep.subr.mxu0 0.0
    %2092 = vmatpush1.msra.mxu0 0.0
    %2093 = vmatprep.subr.mxu0 0.0
    %2094 = vmatpush1.msra.mxu0 0.0
    %2095 = vmatprep.subr.mxu0 0.0
    %2096 = vmatpush1.msra.mxu0 0.0
    %2097 = vmatprep.subr.mxu0 0.0
    %2098 = vmatpush1.msra.mxu0 0.0
    %2099 = vmatprep.subr.mxu0 0.0
    %2100 = vmatpush1.msra.mxu0 0.0
    %2101 = vmatprep.subr.mxu0 0.0
    %2102 = vmatpush1.msra.mxu0 0.0
    %2103 = vmatprep.subr.mxu0 0.0
    %2104 = vmatpush1.msra.mxu0 0.0
    %2105 = vmatprep.subr.mxu0 0.0
    %2106 = vmatpush1.msra.mxu0 0.0
    %2107 = vmatprep.subr.mxu0 0.0
    %2108 = vmatpush1.msra.mxu0 0.0
    %2109 = vmatprep.subr.mxu0 0.0
    %2110 = vmatpush1.msra.mxu0 0.0
    %2111 = vmatprep.subr.mxu0 0.0
    %2112 = vmatpush1.msra.mxu0 0.0
    %2113 = vmatprep.subr.mxu0 0.0
    %2114 = vmatpush1.msra.mxu0 0.0
    %2115 = vmatprep.subr.mxu0 0.0
    %2116 = vmatpush1.msra.mxu0 0.0
    %2117 = vmatprep.subr.mxu0 0.0
    %2118 = vmatpush1.msra.mxu0 0.0
    %2119 = vmatprep.subr.mxu0 0.0
    %2120 = vmatpush1.msra.mxu0 0.0
    %2121 = vmatprep.subr.mxu0 0.0
    %2122 = vmatpush1.msra.mxu0 0.0
    %2123 = vmatprep.subr.mxu0 0.0
    %2124 = vmatpush1.msra.mxu0 0.0
    %2125 = vmatprep.subr.mxu0 0.0
    %2126 = vmatpush1.msra.mxu0 0.0
    %2127 = vmatprep.subr.mxu0 0.0
    %2128 = vmatpush1.msra.mxu0 0.0
    %2129 = vmatprep.subr.mxu0 0.0
    %2130 = vmatpush1.msra.mxu0 0.0
    %2131 = vmatprep.subr.mxu0 0.0
    %2132 = vmatpush1.msra.mxu0 0.0
    %2133 = vmatprep.mubr.f32.mxu0 0.0
    %2134 = vmatmul.mubr.f32.gmra.mrb[0].mxu0 %v2067
    %v2135 = vpop.f32.mrb[0].mxu0
    %v2136 = vadd.f32 0.0, %v2135
    %v2137 = vpop.f32.mrb[0].mxu0
    %2138 = vdwg.mxu0
    %v2139 = vadd.f32 %v2062, %v558
    %v2140 = vadd.f32 %v2064, %v558
    %2142 = vrot.lane.b32.xlu0 %v2136, 96
    %v2143 = vpop.permute.xlu0 %2142
    %v2145 = vadd.f32 %v2139, %v2143
    %v2146 = vxor.u32 %v2145, 2147483648
    %v2147 = vmul.f32 %v2146, 1.442695
    %v2148 = vpow.pop %v2147
    %v2149 = vadd.f32 %v2148, 1.0
    %v2150 = vrcp.pop %v2149
    %v2151 = vmul.f32 1.0, %v2150
    %v2152 = vadd.f32 %v2140, %v2143
    %v2153 = vxor.u32 %v2152, 2147483648
    %v2154 = vmul.f32 %v2153, 1.442695
    %v2155 = vpow.pop %v2154
    %v2156 = vadd.f32 %v2155, 1.0
    %v2157 = vrcp.pop %v2156
    %v2158 = vmul.f32 1.0, %v2157
    %v2159 = vadd.f32 %v2136, %v581
    %2161 = vrot.lane.b32.xlu0 %v2159, 32
    %v2162 = vpop.permute.xlu0 %2161
    %v2164 = vmul.f32 %v2151, %v2162
    %2166 = vrot.lane.b32.xlu0 %v2164, 64
    %v2167 = vpop.permute.xlu0 %2166
    %v2169 = vadd.f32 %v2140, %v2167
    %v2170 = vtanh.pop %v2169
    %v2171 = vsub.f32 1.0, %v2158
    %2173 = vrot.lane.b32.xlu0 %v2170, 96
    %v2174 = vpop.permute.xlu0 %2173
    %v2176 = vmul.f32 %v2171, %v2174
    %v2177 = vmul.f32 %v2158, %v1982
    %v2178 = vadd.f32 %v2176, %v2177
    %v2179 = vrot.slane %v832, 6
    %v2181 = vrot.slane %v1062, 4
    %v2183 = vrot.slane %v1292, 2
    %v2185 = vrot.slane %v1752, 6
    %v2187 = vrot.slane %v1982, 4
    %v2190 = vrot.slane %v2178, 2
    %vm2192 = vcmask 1041408
    %v2193 = vsel %vm2192, %v602, %v2179
    %vm2194 = vcmask 1043456
    %v2195 = vsel %vm2194, %v2193, %v2181
    %vm2196 = vcmask 1045504
    %v2197 = vsel %vm2196, %v2195, %v2183
    %v2198 = vsel %vm2192, %v1522, %v2185
    %v2199 = vsel %vm2194, %v2198, %v2187
    %v2200 = vsel %vm2196, %v2199, %v2190
    %2201 = vst.msk [vmem:[#allocation8] sm:$0xff] %vm81, %v2197
    %2202 = vst.msk [vmem:[#allocation8 + $0x8] sm:$0xff] %vm81, %v2200
    %vm2204 = vcmask 254976
    %2205 = vst.msk [vmem:[#allocation9] sm:$0x3] %vm2204, %v1992
    %s2206 = scalar_lea.vmem [#allocation9], 2
    %2207 = vst.msk [vmem:[%s2206] sm:$0x3] %vm2204, %v2178
    // Predicated region
    $region38: #{decoder_forward.1} parent=1 // pred_check
      _
    $region39: #{decoder_forward.1} parent=1 // pred_check_branch
      %2209 = sbr.rel (0) target = $region41
    $region40: #{decoder_forward.1} parent=1 // pred_region
      %s2211 = ssub.s32 256, 256
      %2212 = vsyncadd [#allocation4], %s2211
      %s2213 = sshll.u32 [#allocation8], 4
      %s2214 = int_to_ptr.vmem [resolvable:$true] %s2213
      %2219 = dma.vmem_to_hbm [thread:$0]  %s2214, 256, %s6, [#allocation4], 128, 128, 8
    $region41: #{decoder_forward.1} parent=1 // pred_fallthru
      _
    // Predicated region
    $region42: #{decoder_forward.1} parent=1 // pred_check
      _
    $region43: #{decoder_forward.1} parent=1 // pred_check_branch
      %2221 = sbr.rel (0) target = $region45
    $region44: #{decoder_forward.1} parent=1 // pred_region
      %s2223 = ssub.s32 64, 64
      %2224 = vsyncadd [#allocation10], %s2223
      %s2225 = sshll.u32 [#allocation9], 4
      %s2226 = int_to_ptr.vmem [resolvable:$true] %s2225
      %2231 = dma.vmem_to_hbm [thread:$0]  %s2226, 64, %s7, [#allocation10], 32, 32, 2
    $region45: #{decoder_forward.1} parent=1 // pred_fallthru
      _
    // Predicated region
    $region46: #{decoder_forward.1} parent=1 // pred_check
      _
    $region47: #{decoder_forward.1} parent=1 // pred_check_branch
      %2233 = sbr.rel (0) target = $region49
    $region48: #{decoder_forward.1} parent=1 // pred_region
      %2234 = dma.done [#allocation4], 256
    $region49: #{decoder_forward.1} parent=1 // pred_fallthru
      _
    // Predicated region
    $region50: #{decoder_forward.1} parent=1 // pred_check
      _
    $region51: #{decoder_forward.1} parent=1 // pred_check_branch
      %2236 = sbr.rel (0) target = $region53
    $region52: #{decoder_forward.1} parent=1 // pred_region
      %2237 = dma.done [#allocation10], 64
    $region53: #{decoder_forward.1} parent=1 // pred_fallthru
      _
    %2238 = vsyncpa [#allocation3], 1
    %2239 = vsyncpa [#allocation6], 1
    %2240 = vsyncpa [#allocation4], 1
    %2241 = vsyncpa [#allocation10], 1

</llo_original>
